<compile_context>
chip_gen: v6e
topology: v6e:2x2x1
jax: 0.10.0
libtpu: 0.0.40
codegen_flags: <defaults>
</compile_context>

<pallas_src>
import functools

import jax
import jax.numpy as jnp
from jax.experimental import pallas as pl
from jax.experimental.pallas import tpu as pltpu  # noqa: F401  (not needed: no scratch/DMA)


def _round_up(n, m):
    return ((n + m - 1) // m) * m


def _full_block(shape):
    idx = (0,) * len(shape)
    return pl.BlockSpec(shape, lambda idx=idx: idx)


# ---------------------------------------------------------------------------
# Fused Pallas kernel: all LSTM layers + final Linear in one invocation.
# ---------------------------------------------------------------------------
def _fused_lstm_fc_kernel(x_ref, w_ref, out_ref, *, num_layers, hidden_size,
                          seq_len, batch_pad, in_dim_pad, out_size, offsets):
    H, T, BP = hidden_size, seq_len, batch_pad

    # ---- Unpack the single weight slab with static, sublane-aligned slices.
    #      (All offsets are compile-time multiples of 8 -> no pl.multiple_of needed.)
    wih, whh, bias = [], [], []
    for l in range(num_layers):
        o_wih, o_whh, o_b = offsets[3 * l], offsets[3 * l + 1], offsets[3 * l + 2]
        rows = in_dim_pad if l == 0 else H
        wih.append(w_ref[o_wih:o_wih + rows, :])      # (rows, 4H)
        whh.append(w_ref[o_whh:o_whh + H, :])         # (H, 4H)
        bias.append(w_ref[o_b:o_b + 1, :])            # (1, 4H)
    o_fcw, o_fcb = offsets[3 * num_layers], offsets[3 * num_layers + 1]

    # Layer-0 input projection for ALL timesteps in one MXU pass (no recurrent
    # dependency -> off the serial critical path); bias folded in here.
    gx0 = jnp.dot(x_ref[...], wih[0], preferred_element_type=jnp.float32) + bias[0]

    h = [jnp.zeros((BP, H), jnp.float32) for _ in range(num_layers)]
    c = [jnp.zeros((BP, H), jnp.float32) for _ in range(num_layers)]

    # Wavefront interleave: layer l at timestep t only needs layer l-1 at timestep t,
    # so it is emitted immediately after it.  The fully-unrolled straight-line code lets
    # the scheduler overlap layer l step t with layer 0 step t+1.
    for t in range(T):
        for l in range(num_layers):
            if l == 0:
                # Aligned full-vreg timestep slice (BP == 8 rows) + recurrent dot.
                gates = gx0[t * BP:(t + 1) * BP, :] + jnp.dot(
                    h[0], whh[0], preferred_element_type=jnp.float32)
            else:
                gates = (jnp.dot(h[l - 1], wih[l], preferred_element_type=jnp.float32)
                         + jnp.dot(h[l], whh[l], preferred_element_type=jnp.float32)
                         + bias[l])
            # Whole-tile EUP activations (gate order [i, f, g, o]); slice afterwards.
            sig = jax.nn.sigmoid(gates)
            tnh = jnp.tanh(gates)
            c[l] = sig[:, H:2 * H] * c[l] + sig[:, 0:H] * tnh[:, 2 * H:3 * H]
            h[l] = sig[:, 3 * H:4 * H] * jnp.tanh(c[l])

    # Final Linear fused in: h[top] == out[:, -1, :]; dropout (eval) = identity.
    h_top = h[num_layers - 1]
    fc_b = w_ref[o_fcb:o_fcb + 1, :]
    if out_size == 1:
        # (B,H)@(H,1) at the chain tail is cheaper as VPU multiply + lane reduction.
        fc_w_row = w_ref[o_fcw:o_fcw + 1, :]          # lanes [0:H] hold the fc weights
        y = jnp.sum(h_top * fc_w_row[:, :H], axis=-1, keepdims=True) + fc_b[:, :1]
    else:
        fc_w = w_ref[o_fcw:o_fcw + H, :]              # (H, >=out_size), zero-padded lanes
        y = (jnp.dot(h_top, fc_w, preferred_element_type=jnp.float32)[:, :out_size]
             + fc_b[:, :out_size])
    out_ref[...] = y.astype(out_ref.dtype)


# ---------------------------------------------------------------------------
# Weight packing: one row-padded (rows, 4H) slab -> a single HBM->VMEM DMA.
# ---------------------------------------------------------------------------
def _pack_weight_slab(params, hidden_size, in_dim_pad):
    H = hidden_size
    G = 4 * H
    out_size = params["fc_w_t"].shape[1]
    assert out_size <= G, "output_size must fit in the 4H-wide slab"
    sections, offsets = [], []
    off = 0

    def add(a):
        nonlocal off
        rows = _round_up(a.shape[0], 8)
        a = jnp.pad(a, ((0, rows - a.shape[0]), (0, G - a.shape[1])))
        offsets.append(off)
        sections.append(a)
        off += rows

    for l, layer in enumerate(params["lstm"]):
        w_ih_t = layer["w_ih_t"]
        if l == 0:
            # Zero rows match the zero-padded x feature columns (contribute nothing).
            w_ih_t = jnp.pad(w_ih_t, ((0, in_dim_pad - w_ih_t.shape[0]), (0, 0)))
        add(w_ih_t)                    # (in_dim_pad or H, 4H)
        add(layer["w_hh_t"])           # (H, 4H)
        add(layer["bias"])             # (1, 4H)

    if out_size == 1:
        add(params["fc_w_t"].T)        # row form (1, H): VPU-reduce fc path
    else:
        add(params["fc_w_t"])          # (H, out_size): MXU fc path
    add(params["fc_b"])                # (1, out_size)
    return jnp.concatenate(sections, axis=0), tuple(offsets)


# ---------------------------------------------------------------------------
# Wrapper
# ---------------------------------------------------------------------------
@functools.partial(jax.jit, static_argnames=("hidden_size",))
def lstm_model_forward(params, x, *, hidden_size):
    """x: (B, T, D_in) float32 -> (B, output_size) float32."""
    B, T, D = x.shape
    num_layers = len(params["lstm"])
    out_size = params["fc_w_t"].shape[1]
    H = hidden_size
    BP = _round_up(max(B, 8), 8)       # batch padded to the f32 sublane tile
    DP = _round_up(D, 8)               # input features padded (matching zero W rows)

    # Time-major, flattened to (T*BP, DP): each timestep occupies an aligned 8-row block.
    x_tm = jnp.transpose(x, (1, 0, 2))
    x_tm = jnp.pad(x_tm, ((0, 0), (0, BP - B), (0, DP - D)))
    x_flat = x_tm.reshape(T * BP, DP)

    slab, offsets = _pack_weight_slab(params, H, DP)

    kernel = functools.partial(
        _fused_lstm_fc_kernel, num_layers=num_layers, hidden_size=H, seq_len=T,
        batch_pad=BP, in_dim_pad=DP, out_size=out_size, offsets=offsets)

    out_pad = pl.pallas_call(
        kernel,
        out_shape=jax.ShapeDtypeStruct((BP, out_size), jnp.float32),
        in_specs=[_full_block(x_flat.shape), _full_block(slab.shape)],
        out_specs=_full_block((BP, out_size)),
    )(x_flat, slab)
    # Padded batch rows carry bias-driven (nonzero) state; only the real rows leave.
    return out_pad[:B]


# ---------------------------------------------------------------------------
# Parameter init (PyTorch-style U(-1/sqrt(H), 1/sqrt(H)))
# ---------------------------------------------------------------------------
def init_params(key, input_size, hidden_size, num_layers, output_size):
    params = {"lstm": []}
    bound = 1.0 / jnp.sqrt(jnp.float32(hidden_size))
    for layer in range(num_layers):
        in_dim = input_size if layer == 0 else hidden_size
        key, k1, k2, k3, k4 = jax.random.split(key, 5)
        w_ih = jax.random.uniform(k1, (4 * hidden_size, in_dim),
                                  jnp.float32, -bound, bound)
        w_hh = jax.random.uniform(k2, (4 * hidden_size, hidden_size),
                                  jnp.float32, -bound, bound)
        b_ih = jax.random.uniform(k3, (4 * hidden_size,),
                                  jnp.float32, -bound, bound)
        b_hh = jax.random.uniform(k4, (4 * hidden_size,),
                                  jnp.float32, -bound, bound)
        params["lstm"].append({
            "w_ih_t": w_ih.T,                                 # (in_dim, 4H)
            "w_hh_t": w_hh.T,                                 # (H, 4H)
            "bias": (b_ih + b_hh).reshape(1, 4 * hidden_size),
        })
    key, k1, k2 = jax.random.split(key, 3)
    fc_w = jax.random.uniform(k1, (output_size, hidden_size),
                              jnp.float32, -bound, bound)
    fc_b = jax.random.uniform(k2, (output_size,),
                              jnp.float32, -bound, bound)
    params["fc_w_t"] = fc_w.T                                 # (H, O)
    params["fc_b"] = fc_b.reshape(1, output_size)
    return params


# ---------------------------------------------------------------------------
# Pure-JAX reference (numerical sanity check)
# ---------------------------------------------------------------------------
def reference_forward(params, x, hidden_size):
    B = x.shape[0]
    h_seq = jnp.transpose(x, (1, 0, 2))
    for layer in params["lstm"]:
        def step(carry, x_t, layer=layer):
            h, c = carry
            gates = x_t @ layer["w_ih_t"] + h @ layer["w_hh_t"] + layer["bias"]
            H = hidden_size
            i = jax.nn.sigmoid(gates[:, :H])
            f = jax.nn.sigmoid(gates[:, H:2 * H])
            g = jnp.tanh(gates[:, 2 * H:3 * H])
            o = jax.nn.sigmoid(gates[:, 3 * H:])
            c = f * c + i * g
            h = o * jnp.tanh(c)
            return (h, c), h
        init = (jnp.zeros((B, hidden_size), jnp.float32),
                jnp.zeros((B, hidden_size), jnp.float32))
        _, h_seq = jax.lax.scan(step, init, h_seq)
    return h_seq[-1] @ params["fc_w_t"] + params["fc_b"]


# ---------------------------------------------------------------------------
if __name__ == "__main__":
    batch, seq_len = 2, 8
    input_size, hidden_size, num_layers, output_size = 4, 32, 2, 1

    key = jax.random.PRNGKey(0)
    key_p, key_x = jax.random.split(key)
    params = init_params(key_p, input_size, hidden_size, num_layers, output_size)
    x = jax.random.normal(key_x, (batch, seq_len, input_size), jnp.float32)

    out = jax.block_until_ready(lstm_model_forward(params, x, hidden_size=hidden_size))
    ref = jax.block_until_ready(reference_forward(params, x, hidden_size))
    assert out.shape == (batch, output_size)
    assert jnp.allclose(out, ref, rtol=1e-3, atol=1e-3), (out, ref)

    print("KERNEL_OK")
</pallas_src>

<mosaic_0001>
module attributes {stable_mosaic.version = 11 : i64} {
  func.func @_fused_lstm_fc_kernel(%arg0: memref<64x8xf32, #tpu.memory_space<vmem>>, %arg1: memref<136x128xf32, #tpu.memory_space<vmem>>, %arg2: memref<8x1xf32, #tpu.memory_space<vmem>>) attributes {dimension_semantics = [], scalar_prefetch = 0 : i64, scratch_operands = 0 : i64, tpu.core_type = #tpu.core_type<tc>} {
    %c0 = arith.constant 0 : index
    %c0_0 = arith.constant 0 : index
    %0 = vector.load %arg1[%c0, %c0_0] : memref<136x128xf32, #tpu.memory_space<vmem>>, vector<8x128xf32>
    %c8 = arith.constant 8 : index
    %c0_1 = arith.constant 0 : index
    %1 = vector.load %arg1[%c8, %c0_1] : memref<136x128xf32, #tpu.memory_space<vmem>>, vector<32x128xf32>
    %c40 = arith.constant 40 : index
    %c0_2 = arith.constant 0 : index
    %2 = vector.load %arg1[%c40, %c0_2] : memref<136x128xf32, #tpu.memory_space<vmem>>, vector<1x128xf32>
    %c48 = arith.constant 48 : index
    %c0_3 = arith.constant 0 : index
    %3 = vector.load %arg1[%c48, %c0_3] : memref<136x128xf32, #tpu.memory_space<vmem>>, vector<32x128xf32>
    %c80 = arith.constant 80 : index
    %c0_4 = arith.constant 0 : index
    %4 = vector.load %arg1[%c80, %c0_4] : memref<136x128xf32, #tpu.memory_space<vmem>>, vector<32x128xf32>
    %c112 = arith.constant 112 : index
    %c0_5 = arith.constant 0 : index
    %5 = vector.load %arg1[%c112, %c0_5] : memref<136x128xf32, #tpu.memory_space<vmem>>, vector<1x128xf32>
    %c0_6 = arith.constant 0 : index
    %c0_7 = arith.constant 0 : index
    %6 = vector.load %arg0[%c0_6, %c0_7] : memref<64x8xf32, #tpu.memory_space<vmem>>, vector<64x8xf32>
    %cst = arith.constant dense<0.000000e+00> : vector<64x128xf32>
    %7 = tpu.matmul %6, %0, %cst {dimension_numbers = #tpu.dot_dimension_numbers<[1], [0], [0], [1], [0, 0, 1, 1], [], []>} : vector<64x8xf32>, vector<8x128xf32>, vector<64x128xf32> -> vector<64x128xf32>
    %8 = vector.broadcast %2 : vector<1x128xf32> to vector<64x128xf32>
    %9 = arith.addf %7, %8 : vector<64x128xf32>
    %cst_8 = arith.constant 0.000000e+00 : f32
    %10 = vector.broadcast %cst_8 : f32 to vector<8x32xf32>
    %cst_9 = arith.constant 0.000000e+00 : f32
    %11 = vector.broadcast %cst_9 : f32 to vector<8x32xf32>
    %cst_10 = arith.constant 0.000000e+00 : f32
    %12 = vector.broadcast %cst_10 : f32 to vector<8x32xf32>
    %cst_11 = arith.constant 0.000000e+00 : f32
    %13 = vector.broadcast %cst_11 : f32 to vector<8x32xf32>
    %14 = vector.extract_strided_slice %9 {offsets = [0, 0], sizes = [8, 128], strides = [1, 1]} : vector<64x128xf32> to vector<8x128xf32>
    %cst_12 = arith.constant dense<0.000000e+00> : vector<8x128xf32>
    %15 = tpu.matmul %10, %1, %cst_12 {dimension_numbers = #tpu.dot_dimension_numbers<[1], [0], [0], [1], [0, 0, 1, 1], [], []>} : vector<8x32xf32>, vector<32x128xf32>, vector<8x128xf32> -> vector<8x128xf32>
    %16 = arith.addf %14, %15 : vector<8x128xf32>
    %17 = arith.negf %16 : vector<8x128xf32>
    %18 = math.exp %17 : vector<8x128xf32>
    %cst_13 = arith.constant 1.000000e+00 : f32
    %19 = vector.broadcast %cst_13 : f32 to vector<8x128xf32>
    %20 = arith.addf %19, %18 : vector<8x128xf32>
    %21 = arith.divf %19, %20 : vector<8x128xf32>
    %22 = math.tanh %16 : vector<8x128xf32>
    %23 = vector.extract_strided_slice %21 {offsets = [0, 32], sizes = [8, 32], strides = [1, 1]} : vector<8x128xf32> to vector<8x32xf32>
    %24 = arith.mulf %23, %12 : vector<8x32xf32>
    %25 = vector.extract_strided_slice %21 {offsets = [0, 0], sizes = [8, 32], strides = [1, 1]} : vector<8x128xf32> to vector<8x32xf32>
    %26 = vector.extract_strided_slice %22 {offsets = [0, 64], sizes = [8, 32], strides = [1, 1]} : vector<8x128xf32> to vector<8x32xf32>
    %27 = arith.mulf %25, %26 : vector<8x32xf32>
    %28 = arith.addf %24, %27 : vector<8x32xf32>
    %29 = vector.extract_strided_slice %21 {offsets = [0, 96], sizes = [8, 32], strides = [1, 1]} : vector<8x128xf32> to vector<8x32xf32>
    %30 = math.tanh %28 : vector<8x32xf32>
    %31 = arith.mulf %29, %30 : vector<8x32xf32>
    %cst_14 = arith.constant dense<0.000000e+00> : vector<8x128xf32>
    %32 = tpu.matmul %31, %3, %cst_14 {dimension_numbers = #tpu.dot_dimension_numbers<[1], [0], [0], [1], [0, 0, 1, 1], [], []>} : vector<8x32xf32>, vector<32x128xf32>, vector<8x128xf32> -> vector<8x128xf32>
    %cst_15 = arith.constant dense<0.000000e+00> : vector<8x128xf32>
    %33 = tpu.matmul %11, %4, %cst_15 {dimension_numbers = #tpu.dot_dimension_numbers<[1], [0], [0], [1], [0, 0, 1, 1], [], []>} : vector<8x32xf32>, vector<32x128xf32>, vector<8x128xf32> -> vector<8x128xf32>
    %34 = arith.addf %32, %33 : vector<8x128xf32>
    %35 = vector.broadcast %5 : vector<1x128xf32> to vector<8x128xf32>
    %36 = arith.addf %34, %35 : vector<8x128xf32>
    %37 = arith.negf %36 : vector<8x128xf32>
    %38 = math.exp %37 : vector<8x128xf32>
    %cst_16 = arith.constant 1.000000e+00 : f32
    %39 = vector.broadcast %cst_16 : f32 to vector<8x128xf32>
    %40 = arith.addf %39, %38 : vector<8x128xf32>
    %41 = arith.divf %39, %40 : vector<8x128xf32>
    %42 = math.tanh %36 : vector<8x128xf32>
    %43 = vector.extract_strided_slice %41 {offsets = [0, 32], sizes = [8, 32], strides = [1, 1]} : vector<8x128xf32> to vector<8x32xf32>
    %44 = arith.mulf %43, %13 : vector<8x32xf32>
    %45 = vector.extract_strided_slice %41 {offsets = [0, 0], sizes = [8, 32], strides = [1, 1]} : vector<8x128xf32> to vector<8x32xf32>
    %46 = vector.extract_strided_slice %42 {offsets = [0, 64], sizes = [8, 32], strides = [1, 1]} : vector<8x128xf32> to vector<8x32xf32>
    %47 = arith.mulf %45, %46 : vector<8x32xf32>
    %48 = arith.addf %44, %47 : vector<8x32xf32>
    %49 = vector.extract_strided_slice %41 {offsets = [0, 96], sizes = [8, 32], strides = [1, 1]} : vector<8x128xf32> to vector<8x32xf32>
    %50 = math.tanh %48 : vector<8x32xf32>
    %51 = arith.mulf %49, %50 : vector<8x32xf32>
    %52 = vector.extract_strided_slice %9 {offsets = [8, 0], sizes = [8, 128], strides = [1, 1]} : vector<64x128xf32> to vector<8x128xf32>
    %cst_17 = arith.constant dense<0.000000e+00> : vector<8x128xf32>
    %53 = tpu.matmul %31, %1, %cst_17 {dimension_numbers = #tpu.dot_dimension_numbers<[1], [0], [0], [1], [0, 0, 1, 1], [], []>} : vector<8x32xf32>, vector<32x128xf32>, vector<8x128xf32> -> vector<8x128xf32>
    %54 = arith.addf %52, %53 : vector<8x128xf32>
    %55 = arith.negf %54 : vector<8x128xf32>
    %56 = math.exp %55 : vector<8x128xf32>
    %cst_18 = arith.constant 1.000000e+00 : f32
    %57 = vector.broadcast %cst_18 : f32 to vector<8x128xf32>
    %58 = arith.addf %57, %56 : vector<8x128xf32>
    %59 = arith.divf %57, %58 : vector<8x128xf32>
    %60 = math.tanh %54 : vector<8x128xf32>
    %61 = vector.extract_strided_slice %59 {offsets = [0, 32], sizes = [8, 32], strides = [1, 1]} : vector<8x128xf32> to vector<8x32xf32>
    %62 = arith.mulf %61, %28 : vector<8x32xf32>
    %63 = vector.extract_strided_slice %59 {offsets = [0, 0], sizes = [8, 32], strides = [1, 1]} : vector<8x128xf32> to vector<8x32xf32>
    %64 = vector.extract_strided_slice %60 {offsets = [0, 64], sizes = [8, 32], strides = [1, 1]} : vector<8x128xf32> to vector<8x32xf32>
    %65 = arith.mulf %63, %64 : vector<8x32xf32>
    %66 = arith.addf %62, %65 : vector<8x32xf32>
    %67 = vector.extract_strided_slice %59 {offsets = [0, 96], sizes = [8, 32], strides = [1, 1]} : vector<8x128xf32> to vector<8x32xf32>
    %68 = math.tanh %66 : vector<8x32xf32>
    %69 = arith.mulf %67, %68 : vector<8x32xf32>
    %cst_19 = arith.constant dense<0.000000e+00> : vector<8x128xf32>
    %70 = tpu.matmul %69, %3, %cst_19 {dimension_numbers = #tpu.dot_dimension_numbers<[1], [0], [0], [1], [0, 0, 1, 1], [], []>} : vector<8x32xf32>, vector<32x128xf32>, vector<8x128xf32> -> vector<8x128xf32>
    %cst_20 = arith.constant dense<0.000000e+00> : vector<8x128xf32>
    %71 = tpu.matmul %51, %4, %cst_20 {dimension_numbers = #tpu.dot_dimension_numbers<[1], [0], [0], [1], [0, 0, 1, 1], [], []>} : vector<8x32xf32>, vector<32x128xf32>, vector<8x128xf32> -> vector<8x128xf32>
    %72 = arith.addf %70, %71 : vector<8x128xf32>
    %73 = vector.broadcast %5 : vector<1x128xf32> to vector<8x128xf32>
    %74 = arith.addf %72, %73 : vector<8x128xf32>
    %75 = arith.negf %74 : vector<8x128xf32>
    %76 = math.exp %75 : vector<8x128xf32>
    %cst_21 = arith.constant 1.000000e+00 : f32
    %77 = vector.broadcast %cst_21 : f32 to vector<8x128xf32>
    %78 = arith.addf %77, %76 : vector<8x128xf32>
    %79 = arith.divf %77, %78 : vector<8x128xf32>
    %80 = math.tanh %74 : vector<8x128xf32>
    %81 = vector.extract_strided_slice %79 {offsets = [0, 32], sizes = [8, 32], strides = [1, 1]} : vector<8x128xf32> to vector<8x32xf32>
    %82 = arith.mulf %81, %48 : vector<8x32xf32>
    %83 = vector.extract_strided_slice %79 {offsets = [0, 0], sizes = [8, 32], strides = [1, 1]} : vector<8x128xf32> to vector<8x32xf32>
    %84 = vector.extract_strided_slice %80 {offsets = [0, 64], sizes = [8, 32], strides = [1, 1]} : vector<8x128xf32> to vector<8x32xf32>
    %85 = arith.mulf %83, %84 : vector<8x32xf32>
    %86 = arith.addf %82, %85 : vector<8x32xf32>
    %87 = vector.extract_strided_slice %79 {offsets = [0, 96], sizes = [8, 32], strides = [1, 1]} : vector<8x128xf32> to vector<8x32xf32>
    %88 = math.tanh %86 : vector<8x32xf32>
    %89 = arith.mulf %87, %88 : vector<8x32xf32>
    %90 = vector.extract_strided_slice %9 {offsets = [16, 0], sizes = [8, 128], strides = [1, 1]} : vector<64x128xf32> to vector<8x128xf32>
    %cst_22 = arith.constant dense<0.000000e+00> : vector<8x128xf32>
    %91 = tpu.matmul %69, %1, %cst_22 {dimension_numbers = #tpu.dot_dimension_numbers<[1], [0], [0], [1], [0, 0, 1, 1], [], []>} : vector<8x32xf32>, vector<32x128xf32>, vector<8x128xf32> -> vector<8x128xf32>
    %92 = arith.addf %90, %91 : vector<8x128xf32>
    %93 = arith.negf %92 : vector<8x128xf32>
    %94 = math.exp %93 : vector<8x128xf32>
    %cst_23 = arith.constant 1.000000e+00 : f32
    %95 = vector.broadcast %cst_23 : f32 to vector<8x128xf32>
    %96 = arith.addf %95, %94 : vector<8x128xf32>
    %97 = arith.divf %95, %96 : vector<8x128xf32>
    %98 = math.tanh %92 : vector<8x128xf32>
    %99 = vector.extract_strided_slice %97 {offsets = [0, 32], sizes = [8, 32], strides = [1, 1]} : vector<8x128xf32> to vector<8x32xf32>
    %100 = arith.mulf %99, %66 : vector<8x32xf32>
    %101 = vector.extract_strided_slice %97 {offsets = [0, 0], sizes = [8, 32], strides = [1, 1]} : vector<8x128xf32> to vector<8x32xf32>
    %102 = vector.extract_strided_slice %98 {offsets = [0, 64], sizes = [8, 32], strides = [1, 1]} : vector<8x128xf32> to vector<8x32xf32>
    %103 = arith.mulf %101, %102 : vector<8x32xf32>
    %104 = arith.addf %100, %103 : vector<8x32xf32>
    %105 = vector.extract_strided_slice %97 {offsets = [0, 96], sizes = [8, 32], strides = [1, 1]} : vector<8x128xf32> to vector<8x32xf32>
    %106 = math.tanh %104 : vector<8x32xf32>
    %107 = arith.mulf %105, %106 : vector<8x32xf32>
    %cst_24 = arith.constant dense<0.000000e+00> : vector<8x128xf32>
    %108 = tpu.matmul %107, %3, %cst_24 {dimension_numbers = #tpu.dot_dimension_numbers<[1], [0], [0], [1], [0, 0, 1, 1], [], []>} : vector<8x32xf32>, vector<32x128xf32>, vector<8x128xf32> -> vector<8x128xf32>
    %cst_25 = arith.constant dense<0.000000e+00> : vector<8x128xf32>
    %109 = tpu.matmul %89, %4, %cst_25 {dimension_numbers = #tpu.dot_dimension_numbers<[1], [0], [0], [1], [0, 0, 1, 1], [], []>} : vector<8x32xf32>, vector<32x128xf32>, vector<8x128xf32> -> vector<8x128xf32>
    %110 = arith.addf %108, %109 : vector<8x128xf32>
    %111 = vector.broadcast %5 : vector<1x128xf32> to vector<8x128xf32>
    %112 = arith.addf %110, %111 : vector<8x128xf32>
    %113 = arith.negf %112 : vector<8x128xf32>
    %114 = math.exp %113 : vector<8x128xf32>
    %cst_26 = arith.constant 1.000000e+00 : f32
    %115 = vector.broadcast %cst_26 : f32 to vector<8x128xf32>
    %116 = arith.addf %115, %114 : vector<8x128xf32>
    %117 = arith.divf %115, %116 : vector<8x128xf32>
    %118 = math.tanh %112 : vector<8x128xf32>
    %119 = vector.extract_strided_slice %117 {offsets = [0, 32], sizes = [8, 32], strides = [1, 1]} : vector<8x128xf32> to vector<8x32xf32>
    %120 = arith.mulf %119, %86 : vector<8x32xf32>
    %121 = vector.extract_strided_slice %117 {offsets = [0, 0], sizes = [8, 32], strides = [1, 1]} : vector<8x128xf32> to vector<8x32xf32>
    %122 = vector.extract_strided_slice %118 {offsets = [0, 64], sizes = [8, 32], strides = [1, 1]} : vector<8x128xf32> to vector<8x32xf32>
    %123 = arith.mulf %121, %122 : vector<8x32xf32>
    %124 = arith.addf %120, %123 : vector<8x32xf32>
    %125 = vector.extract_strided_slice %117 {offsets = [0, 96], sizes = [8, 32], strides = [1, 1]} : vector<8x128xf32> to vector<8x32xf32>
    %126 = math.tanh %124 : vector<8x32xf32>
    %127 = arith.mulf %125, %126 : vector<8x32xf32>
    %128 = vector.extract_strided_slice %9 {offsets = [24, 0], sizes = [8, 128], strides = [1, 1]} : vector<64x128xf32> to vector<8x128xf32>
    %cst_27 = arith.constant dense<0.000000e+00> : vector<8x128xf32>
    %129 = tpu.matmul %107, %1, %cst_27 {dimension_numbers = #tpu.dot_dimension_numbers<[1], [0], [0], [1], [0, 0, 1, 1], [], []>} : vector<8x32xf32>, vector<32x128xf32>, vector<8x128xf32> -> vector<8x128xf32>
    %130 = arith.addf %128, %129 : vector<8x128xf32>
    %131 = arith.negf %130 : vector<8x128xf32>
    %132 = math.exp %131 : vector<8x128xf32>
    %cst_28 = arith.constant 1.000000e+00 : f32
    %133 = vector.broadcast %cst_28 : f32 to vector<8x128xf32>
    %134 = arith.addf %133, %132 : vector<8x128xf32>
    %135 = arith.divf %133, %134 : vector<8x128xf32>
    %136 = math.tanh %130 : vector<8x128xf32>
    %137 = vector.extract_strided_slice %135 {offsets = [0, 32], sizes = [8, 32], strides = [1, 1]} : vector<8x128xf32> to vector<8x32xf32>
    %138 = arith.mulf %137, %104 : vector<8x32xf32>
    %139 = vector.extract_strided_slice %135 {offsets = [0, 0], sizes = [8, 32], strides = [1, 1]} : vector<8x128xf32> to vector<8x32xf32>
    %140 = vector.extract_strided_slice %136 {offsets = [0, 64], sizes = [8, 32], strides = [1, 1]} : vector<8x128xf32> to vector<8x32xf32>
    %141 = arith.mulf %139, %140 : vector<8x32xf32>
    %142 = arith.addf %138, %141 : vector<8x32xf32>
    %143 = vector.extract_strided_slice %135 {offsets = [0, 96], sizes = [8, 32], strides = [1, 1]} : vector<8x128xf32> to vector<8x32xf32>
    %144 = math.tanh %142 : vector<8x32xf32>
    %145 = arith.mulf %143, %144 : vector<8x32xf32>
    %cst_29 = arith.constant dense<0.000000e+00> : vector<8x128xf32>
    %146 = tpu.matmul %145, %3, %cst_29 {dimension_numbers = #tpu.dot_dimension_numbers<[1], [0], [0], [1], [0, 0, 1, 1], [], []>} : vector<8x32xf32>, vector<32x128xf32>, vector<8x128xf32> -> vector<8x128xf32>
    %cst_30 = arith.constant dense<0.000000e+00> : vector<8x128xf32>
    %147 = tpu.matmul %127, %4, %cst_30 {dimension_numbers = #tpu.dot_dimension_numbers<[1], [0], [0], [1], [0, 0, 1, 1], [], []>} : vector<8x32xf32>, vector<32x128xf32>, vector<8x128xf32> -> vector<8x128xf32>
    %148 = arith.addf %146, %147 : vector<8x128xf32>
    %149 = vector.broadcast %5 : vector<1x128xf32> to vector<8x128xf32>
    %150 = arith.addf %148, %149 : vector<8x128xf32>
    %151 = arith.negf %150 : vector<8x128xf32>
    %152 = math.exp %151 : vector<8x128xf32>
    %cst_31 = arith.constant 1.000000e+00 : f32
    %153 = vector.broadcast %cst_31 : f32 to vector<8x128xf32>
    %154 = arith.addf %153, %152 : vector<8x128xf32>
    %155 = arith.divf %153, %154 : vector<8x128xf32>
    %156 = math.tanh %150 : vector<8x128xf32>
    %157 = vector.extract_strided_slice %155 {offsets = [0, 32], sizes = [8, 32], strides = [1, 1]} : vector<8x128xf32> to vector<8x32xf32>
    %158 = arith.mulf %157, %124 : vector<8x32xf32>
    %159 = vector.extract_strided_slice %155 {offsets = [0, 0], sizes = [8, 32], strides = [1, 1]} : vector<8x128xf32> to vector<8x32xf32>
    %160 = vector.extract_strided_slice %156 {offsets = [0, 64], sizes = [8, 32], strides = [1, 1]} : vector<8x128xf32> to vector<8x32xf32>
    %161 = arith.mulf %159, %160 : vector<8x32xf32>
    %162 = arith.addf %158, %161 : vector<8x32xf32>
    %163 = vector.extract_strided_slice %155 {offsets = [0, 96], sizes = [8, 32], strides = [1, 1]} : vector<8x128xf32> to vector<8x32xf32>
    %164 = math.tanh %162 : vector<8x32xf32>
    %165 = arith.mulf %163, %164 : vector<8x32xf32>
    %166 = vector.extract_strided_slice %9 {offsets = [32, 0], sizes = [8, 128], strides = [1, 1]} : vector<64x128xf32> to vector<8x128xf32>
    %cst_32 = arith.constant dense<0.000000e+00> : vector<8x128xf32>
    %167 = tpu.matmul %145, %1, %cst_32 {dimension_numbers = #tpu.dot_dimension_numbers<[1], [0], [0], [1], [0, 0, 1, 1], [], []>} : vector<8x32xf32>, vector<32x128xf32>, vector<8x128xf32> -> vector<8x128xf32>
    %168 = arith.addf %166, %167 : vector<8x128xf32>
    %169 = arith.negf %168 : vector<8x128xf32>
    %170 = math.exp %169 : vector<8x128xf32>
    %cst_33 = arith.constant 1.000000e+00 : f32
    %171 = vector.broadcast %cst_33 : f32 to vector<8x128xf32>
    %172 = arith.addf %171, %170 : vector<8x128xf32>
    %173 = arith.divf %171, %172 : vector<8x128xf32>
    %174 = math.tanh %168 : vector<8x128xf32>
    %175 = vector.extract_strided_slice %173 {offsets = [0, 32], sizes = [8, 32], strides = [1, 1]} : vector<8x128xf32> to vector<8x32xf32>
    %176 = arith.mulf %175, %142 : vector<8x32xf32>
    %177 = vector.extract_strided_slice %173 {offsets = [0, 0], sizes = [8, 32], strides = [1, 1]} : vector<8x128xf32> to vector<8x32xf32>
    %178 = vector.extract_strided_slice %174 {offsets = [0, 64], sizes = [8, 32], strides = [1, 1]} : vector<8x128xf32> to vector<8x32xf32>
    %179 = arith.mulf %177, %178 : vector<8x32xf32>
    %180 = arith.addf %176, %179 : vector<8x32xf32>
    %181 = vector.extract_strided_slice %173 {offsets = [0, 96], sizes = [8, 32], strides = [1, 1]} : vector<8x128xf32> to vector<8x32xf32>
    %182 = math.tanh %180 : vector<8x32xf32>
    %183 = arith.mulf %181, %182 : vector<8x32xf32>
    %cst_34 = arith.constant dense<0.000000e+00> : vector<8x128xf32>
    %184 = tpu.matmul %183, %3, %cst_34 {dimension_numbers = #tpu.dot_dimension_numbers<[1], [0], [0], [1], [0, 0, 1, 1], [], []>} : vector<8x32xf32>, vector<32x128xf32>, vector<8x128xf32> -> vector<8x128xf32>
    %cst_35 = arith.constant dense<0.000000e+00> : vector<8x128xf32>
    %185 = tpu.matmul %165, %4, %cst_35 {dimension_numbers = #tpu.dot_dimension_numbers<[1], [0], [0], [1], [0, 0, 1, 1], [], []>} : vector<8x32xf32>, vector<32x128xf32>, vector<8x128xf32> -> vector<8x128xf32>
    %186 = arith.addf %184, %185 : vector<8x128xf32>
    %187 = vector.broadcast %5 : vector<1x128xf32> to vector<8x128xf32>
    %188 = arith.addf %186, %187 : vector<8x128xf32>
    %189 = arith.negf %188 : vector<8x128xf32>
    %190 = math.exp %189 : vector<8x128xf32>
    %cst_36 = arith.constant 1.000000e+00 : f32
    %191 = vector.broadcast %cst_36 : f32 to vector<8x128xf32>
    %192 = arith.addf %191, %190 : vector<8x128xf32>
    %193 = arith.divf %191, %192 : vector<8x128xf32>
    %194 = math.tanh %188 : vector<8x128xf32>
    %195 = vector.extract_strided_slice %193 {offsets = [0, 32], sizes = [8, 32], strides = [1, 1]} : vector<8x128xf32> to vector<8x32xf32>
    %196 = arith.mulf %195, %162 : vector<8x32xf32>
    %197 = vector.extract_strided_slice %193 {offsets = [0, 0], sizes = [8, 32], strides = [1, 1]} : vector<8x128xf32> to vector<8x32xf32>
    %198 = vector.extract_strided_slice %194 {offsets = [0, 64], sizes = [8, 32], strides = [1, 1]} : vector<8x128xf32> to vector<8x32xf32>
    %199 = arith.mulf %197, %198 : vector<8x32xf32>
    %200 = arith.addf %196, %199 : vector<8x32xf32>
    %201 = vector.extract_strided_slice %193 {offsets = [0, 96], sizes = [8, 32], strides = [1, 1]} : vector<8x128xf32> to vector<8x32xf32>
    %202 = math.tanh %200 : vector<8x32xf32>
    %203 = arith.mulf %201, %202 : vector<8x32xf32>
    %204 = vector.extract_strided_slice %9 {offsets = [40, 0], sizes = [8, 128], strides = [1, 1]} : vector<64x128xf32> to vector<8x128xf32>
    %cst_37 = arith.constant dense<0.000000e+00> : vector<8x128xf32>
    %205 = tpu.matmul %183, %1, %cst_37 {dimension_numbers = #tpu.dot_dimension_numbers<[1], [0], [0], [1], [0, 0, 1, 1], [], []>} : vector<8x32xf32>, vector<32x128xf32>, vector<8x128xf32> -> vector<8x128xf32>
    %206 = arith.addf %204, %205 : vector<8x128xf32>
    %207 = arith.negf %206 : vector<8x128xf32>
    %208 = math.exp %207 : vector<8x128xf32>
    %cst_38 = arith.constant 1.000000e+00 : f32
    %209 = vector.broadcast %cst_38 : f32 to vector<8x128xf32>
    %210 = arith.addf %209, %208 : vector<8x128xf32>
    %211 = arith.divf %209, %210 : vector<8x128xf32>
    %212 = math.tanh %206 : vector<8x128xf32>
    %213 = vector.extract_strided_slice %211 {offsets = [0, 32], sizes = [8, 32], strides = [1, 1]} : vector<8x128xf32> to vector<8x32xf32>
    %214 = arith.mulf %213, %180 : vector<8x32xf32>
    %215 = vector.extract_strided_slice %211 {offsets = [0, 0], sizes = [8, 32], strides = [1, 1]} : vector<8x128xf32> to vector<8x32xf32>
    %216 = vector.extract_strided_slice %212 {offsets = [0, 64], sizes = [8, 32], strides = [1, 1]} : vector<8x128xf32> to vector<8x32xf32>
    %217 = arith.mulf %215, %216 : vector<8x32xf32>
    %218 = arith.addf %214, %217 : vector<8x32xf32>
    %219 = vector.extract_strided_slice %211 {offsets = [0, 96], sizes = [8, 32], strides = [1, 1]} : vector<8x128xf32> to vector<8x32xf32>
    %220 = math.tanh %218 : vector<8x32xf32>
    %221 = arith.mulf %219, %220 : vector<8x32xf32>
    %cst_39 = arith.constant dense<0.000000e+00> : vector<8x128xf32>
    %222 = tpu.matmul %221, %3, %cst_39 {dimension_numbers = #tpu.dot_dimension_numbers<[1], [0], [0], [1], [0, 0, 1, 1], [], []>} : vector<8x32xf32>, vector<32x128xf32>, vector<8x128xf32> -> vector<8x128xf32>
    %cst_40 = arith.constant dense<0.000000e+00> : vector<8x128xf32>
    %223 = tpu.matmul %203, %4, %cst_40 {dimension_numbers = #tpu.dot_dimension_numbers<[1], [0], [0], [1], [0, 0, 1, 1], [], []>} : vector<8x32xf32>, vector<32x128xf32>, vector<8x128xf32> -> vector<8x128xf32>
    %224 = arith.addf %222, %223 : vector<8x128xf32>
    %225 = vector.broadcast %5 : vector<1x128xf32> to vector<8x128xf32>
    %226 = arith.addf %224, %225 : vector<8x128xf32>
    %227 = arith.negf %226 : vector<8x128xf32>
    %228 = math.exp %227 : vector<8x128xf32>
    %cst_41 = arith.constant 1.000000e+00 : f32
    %229 = vector.broadcast %cst_41 : f32 to vector<8x128xf32>
    %230 = arith.addf %229, %228 : vector<8x128xf32>
    %231 = arith.divf %229, %230 : vector<8x128xf32>
    %232 = math.tanh %226 : vector<8x128xf32>
    %233 = vector.extract_strided_slice %231 {offsets = [0, 32], sizes = [8, 32], strides = [1, 1]} : vector<8x128xf32> to vector<8x32xf32>
    %234 = arith.mulf %233, %200 : vector<8x32xf32>
    %235 = vector.extract_strided_slice %231 {offsets = [0, 0], sizes = [8, 32], strides = [1, 1]} : vector<8x128xf32> to vector<8x32xf32>
    %236 = vector.extract_strided_slice %232 {offsets = [0, 64], sizes = [8, 32], strides = [1, 1]} : vector<8x128xf32> to vector<8x32xf32>
    %237 = arith.mulf %235, %236 : vector<8x32xf32>
    %238 = arith.addf %234, %237 : vector<8x32xf32>
    %239 = vector.extract_strided_slice %231 {offsets = [0, 96], sizes = [8, 32], strides = [1, 1]} : vector<8x128xf32> to vector<8x32xf32>
    %240 = math.tanh %238 : vector<8x32xf32>
    %241 = arith.mulf %239, %240 : vector<8x32xf32>
    %242 = vector.extract_strided_slice %9 {offsets = [48, 0], sizes = [8, 128], strides = [1, 1]} : vector<64x128xf32> to vector<8x128xf32>
    %cst_42 = arith.constant dense<0.000000e+00> : vector<8x128xf32>
    %243 = tpu.matmul %221, %1, %cst_42 {dimension_numbers = #tpu.dot_dimension_numbers<[1], [0], [0], [1], [0, 0, 1, 1], [], []>} : vector<8x32xf32>, vector<32x128xf32>, vector<8x128xf32> -> vector<8x128xf32>
    %244 = arith.addf %242, %243 : vector<8x128xf32>
    %245 = arith.negf %244 : vector<8x128xf32>
    %246 = math.exp %245 : vector<8x128xf32>
    %cst_43 = arith.constant 1.000000e+00 : f32
    %247 = vector.broadcast %cst_43 : f32 to vector<8x128xf32>
    %248 = arith.addf %247, %246 : vector<8x128xf32>
    %249 = arith.divf %247, %248 : vector<8x128xf32>
    %250 = math.tanh %244 : vector<8x128xf32>
    %251 = vector.extract_strided_slice %249 {offsets = [0, 32], sizes = [8, 32], strides = [1, 1]} : vector<8x128xf32> to vector<8x32xf32>
    %252 = arith.mulf %251, %218 : vector<8x32xf32>
    %253 = vector.extract_strided_slice %249 {offsets = [0, 0], sizes = [8, 32], strides = [1, 1]} : vector<8x128xf32> to vector<8x32xf32>
    %254 = vector.extract_strided_slice %250 {offsets = [0, 64], sizes = [8, 32], strides = [1, 1]} : vector<8x128xf32> to vector<8x32xf32>
    %255 = arith.mulf %253, %254 : vector<8x32xf32>
    %256 = arith.addf %252, %255 : vector<8x32xf32>
    %257 = vector.extract_strided_slice %249 {offsets = [0, 96], sizes = [8, 32], strides = [1, 1]} : vector<8x128xf32> to vector<8x32xf32>
    %258 = math.tanh %256 : vector<8x32xf32>
    %259 = arith.mulf %257, %258 : vector<8x32xf32>
    %cst_44 = arith.constant dense<0.000000e+00> : vector<8x128xf32>
    %260 = tpu.matmul %259, %3, %cst_44 {dimension_numbers = #tpu.dot_dimension_numbers<[1], [0], [0], [1], [0, 0, 1, 1], [], []>} : vector<8x32xf32>, vector<32x128xf32>, vector<8x128xf32> -> vector<8x128xf32>
    %cst_45 = arith.constant dense<0.000000e+00> : vector<8x128xf32>
    %261 = tpu.matmul %241, %4, %cst_45 {dimension_numbers = #tpu.dot_dimension_numbers<[1], [0], [0], [1], [0, 0, 1, 1], [], []>} : vector<8x32xf32>, vector<32x128xf32>, vector<8x128xf32> -> vector<8x128xf32>
    %262 = arith.addf %260, %261 : vector<8x128xf32>
    %263 = vector.broadcast %5 : vector<1x128xf32> to vector<8x128xf32>
    %264 = arith.addf %262, %263 : vector<8x128xf32>
    %265 = arith.negf %264 : vector<8x128xf32>
    %266 = math.exp %265 : vector<8x128xf32>
    %cst_46 = arith.constant 1.000000e+00 : f32
    %267 = vector.broadcast %cst_46 : f32 to vector<8x128xf32>
    %268 = arith.addf %267, %266 : vector<8x128xf32>
    %269 = arith.divf %267, %268 : vector<8x128xf32>
    %270 = math.tanh %264 : vector<8x128xf32>
    %271 = vector.extract_strided_slice %269 {offsets = [0, 32], sizes = [8, 32], strides = [1, 1]} : vector<8x128xf32> to vector<8x32xf32>
    %272 = arith.mulf %271, %238 : vector<8x32xf32>
    %273 = vector.extract_strided_slice %269 {offsets = [0, 0], sizes = [8, 32], strides = [1, 1]} : vector<8x128xf32> to vector<8x32xf32>
    %274 = vector.extract_strided_slice %270 {offsets = [0, 64], sizes = [8, 32], strides = [1, 1]} : vector<8x128xf32> to vector<8x32xf32>
    %275 = arith.mulf %273, %274 : vector<8x32xf32>
    %276 = arith.addf %272, %275 : vector<8x32xf32>
    %277 = vector.extract_strided_slice %269 {offsets = [0, 96], sizes = [8, 32], strides = [1, 1]} : vector<8x128xf32> to vector<8x32xf32>
    %278 = math.tanh %276 : vector<8x32xf32>
    %279 = arith.mulf %277, %278 : vector<8x32xf32>
    %280 = vector.extract_strided_slice %9 {offsets = [56, 0], sizes = [8, 128], strides = [1, 1]} : vector<64x128xf32> to vector<8x128xf32>
    %cst_47 = arith.constant dense<0.000000e+00> : vector<8x128xf32>
    %281 = tpu.matmul %259, %1, %cst_47 {dimension_numbers = #tpu.dot_dimension_numbers<[1], [0], [0], [1], [0, 0, 1, 1], [], []>} : vector<8x32xf32>, vector<32x128xf32>, vector<8x128xf32> -> vector<8x128xf32>
    %282 = arith.addf %280, %281 : vector<8x128xf32>
    %283 = arith.negf %282 : vector<8x128xf32>
    %284 = math.exp %283 : vector<8x128xf32>
    %cst_48 = arith.constant 1.000000e+00 : f32
    %285 = vector.broadcast %cst_48 : f32 to vector<8x128xf32>
    %286 = arith.addf %285, %284 : vector<8x128xf32>
    %287 = arith.divf %285, %286 : vector<8x128xf32>
    %288 = math.tanh %282 : vector<8x128xf32>
    %289 = vector.extract_strided_slice %287 {offsets = [0, 32], sizes = [8, 32], strides = [1, 1]} : vector<8x128xf32> to vector<8x32xf32>
    %290 = arith.mulf %289, %256 : vector<8x32xf32>
    %291 = vector.extract_strided_slice %287 {offsets = [0, 0], sizes = [8, 32], strides = [1, 1]} : vector<8x128xf32> to vector<8x32xf32>
    %292 = vector.extract_strided_slice %288 {offsets = [0, 64], sizes = [8, 32], strides = [1, 1]} : vector<8x128xf32> to vector<8x32xf32>
    %293 = arith.mulf %291, %292 : vector<8x32xf32>
    %294 = arith.addf %290, %293 : vector<8x32xf32>
    %295 = vector.extract_strided_slice %287 {offsets = [0, 96], sizes = [8, 32], strides = [1, 1]} : vector<8x128xf32> to vector<8x32xf32>
    %296 = math.tanh %294 : vector<8x32xf32>
    %297 = arith.mulf %295, %296 : vector<8x32xf32>
    %cst_49 = arith.constant dense<0.000000e+00> : vector<8x128xf32>
    %298 = tpu.matmul %297, %3, %cst_49 {dimension_numbers = #tpu.dot_dimension_numbers<[1], [0], [0], [1], [0, 0, 1, 1], [], []>} : vector<8x32xf32>, vector<32x128xf32>, vector<8x128xf32> -> vector<8x128xf32>
    %cst_50 = arith.constant dense<0.000000e+00> : vector<8x128xf32>
    %299 = tpu.matmul %279, %4, %cst_50 {dimension_numbers = #tpu.dot_dimension_numbers<[1], [0], [0], [1], [0, 0, 1, 1], [], []>} : vector<8x32xf32>, vector<32x128xf32>, vector<8x128xf32> -> vector<8x128xf32>
    %300 = arith.addf %298, %299 : vector<8x128xf32>
    %301 = vector.broadcast %5 : vector<1x128xf32> to vector<8x128xf32>
    %302 = arith.addf %300, %301 : vector<8x128xf32>
    %303 = arith.negf %302 : vector<8x128xf32>
    %304 = math.exp %303 : vector<8x128xf32>
    %cst_51 = arith.constant 1.000000e+00 : f32
    %305 = vector.broadcast %cst_51 : f32 to vector<8x128xf32>
    %306 = arith.addf %305, %304 : vector<8x128xf32>
    %307 = arith.divf %305, %306 : vector<8x128xf32>
    %308 = math.tanh %302 : vector<8x128xf32>
    %309 = vector.extract_strided_slice %307 {offsets = [0, 32], sizes = [8, 32], strides = [1, 1]} : vector<8x128xf32> to vector<8x32xf32>
    %310 = arith.mulf %309, %276 : vector<8x32xf32>
    %311 = vector.extract_strided_slice %307 {offsets = [0, 0], sizes = [8, 32], strides = [1, 1]} : vector<8x128xf32> to vector<8x32xf32>
    %312 = vector.extract_strided_slice %308 {offsets = [0, 64], sizes = [8, 32], strides = [1, 1]} : vector<8x128xf32> to vector<8x32xf32>
    %313 = arith.mulf %311, %312 : vector<8x32xf32>
    %314 = arith.addf %310, %313 : vector<8x32xf32>
    %315 = vector.extract_strided_slice %307 {offsets = [0, 96], sizes = [8, 32], strides = [1, 1]} : vector<8x128xf32> to vector<8x32xf32>
    %316 = math.tanh %314 : vector<8x32xf32>
    %317 = arith.mulf %315, %316 : vector<8x32xf32>
    %c128 = arith.constant 128 : index
    %c0_52 = arith.constant 0 : index
    %318 = vector.load %arg1[%c128, %c0_52] : memref<136x128xf32, #tpu.memory_space<vmem>>, vector<1x128xf32>
    %c120 = arith.constant 120 : index
    %c0_53 = arith.constant 0 : index
    %319 = vector.load %arg1[%c120, %c0_53] : memref<136x128xf32, #tpu.memory_space<vmem>>, vector<1x128xf32>
    %320 = vector.extract_strided_slice %319 {offsets = [0, 0], sizes = [1, 32], strides = [1, 1]} : vector<1x128xf32> to vector<1x32xf32>
    %321 = vector.broadcast %320 : vector<1x32xf32> to vector<8x32xf32>
    %322 = arith.mulf %317, %321 : vector<8x32xf32>
    %cst_54 = arith.constant dense<0.000000e+00> : vector<8xf32>
    %323 = vector.multi_reduction <add>, %322, %cst_54 [1] : vector<8x32xf32> to vector<8xf32>
    %324 = vector.shape_cast %323 : vector<8xf32> to vector<8x1xf32>
    %325 = vector.extract_strided_slice %318 {offsets = [0, 0], sizes = [1, 1], strides = [1, 1]} : vector<1x128xf32> to vector<1x1xf32>
    %326 = vector.broadcast %325 : vector<1x1xf32> to vector<8x1xf32>
    %327 = arith.addf %324, %326 : vector<8x1xf32>
    %c0_55 = arith.constant 0 : index
    %c0_56 = arith.constant 0 : index
    %328 = vector.load %arg2[%c0_55, %c0_56] : memref<8x1xf32, #tpu.memory_space<vmem>>, vector<8x1xf32>
    tpu.vector_store %arg2[%c0_55, %c0_56], %327 {strides = array<i32>} : memref<8x1xf32, #tpu.memory_space<vmem>>, vector<8x1xf32>,
    return
  }
}

</mosaic_0001>

<llo_original>
// kernel: lstm_model_forward.1
$region0: #{lstm_model_forward.1}
  #allocation0 [shape = 'u32[]', space=smem, size = 0x4, offset = 0x4, fixed_abs, tag = 'smem constant byte address 0x4 - core index']
  #allocation1 [shape = 'u32[144,128]{1,0:T(1,128)}', space=vmem, size = 0x12000, scoped, tag = 'internal scratch']
  %s0 = inlined_call_operand.vmem [shape: f32[64,8], index: 0, kind: input, shape index: {}]
  %s1 = inlined_call_operand.vmem [shape: f32[136,128], index: 1, kind: input, shape index: {}]
  %s2 = inlined_call_operand.vmem [shape: f32[8,1], index: 2, kind: output, shape index: {}]
  %s3 = sld [smem:[#allocation0]]
  $region18: #{lstm_model_forward.1} parent=0
    _
  %s5 = ssub.s32 1, %s3
  %s6 = scalar_select 0, %s5, %s3
  // Predicated region
  $region2: #{lstm_model_forward.1} parent=0 // pred_check
    _
  $region3: #{lstm_model_forward.1} parent=0 // pred_check_branch
    %8 = sbr.rel (0) target = $region5
  $region4: #{lstm_model_forward.1} parent=0 // pred_region
    _
  $region5: #{lstm_model_forward.1} parent=0 // pred_fallthru
    _
  // Predicated region
  $region6: #{lstm_model_forward.1} parent=0 // pred_check
    _
  $region7: #{lstm_model_forward.1} parent=0 // pred_check_branch
    %10 = sbr.rel (0) target = $region9
  $region8: #{lstm_model_forward.1} parent=0 // pred_region
    _
  $region9: #{lstm_model_forward.1} parent=0 // pred_fallthru
    _
  %v11 = vld [vmem:[%s1] sm:$0xff]
  %v12 = vld [vmem:[%s1 + $0x8] sm:$0xff]
  %v13 = vld [vmem:[%s1 + $0x10] sm:$0xff]
  %v14 = vld [vmem:[%s1 + $0x18] sm:$0xff]
  %v15 = vld [vmem:[%s1 + $0x20] sm:$0xff]
  %v16 = vld [vmem:[%s1 + $0x28] sm:$0x1]
  %v17 = vld [vmem:[%s1 + $0x30] sm:$0xff]
  %v18 = vld [vmem:[%s1 + $0x38] sm:$0xff]
  %v19 = vld [vmem:[%s1 + $0x40] sm:$0xff]
  %v20 = vld [vmem:[%s1 + $0x48] sm:$0xff]
  %v21 = vld [vmem:[%s1 + $0x50] sm:$0xff]
  %v22 = vld [vmem:[%s1 + $0x58] sm:$0xff]
  %v23 = vld [vmem:[%s1 + $0x60] sm:$0xff]
  %v24 = vld [vmem:[%s1 + $0x68] sm:$0xff]
  %v25 = vld [vmem:[%s1 + $0x70] sm:$0x1]
  %v26 = vld [vmem:[%s0] sm:$0xff]
  %v27 = vld [vmem:[%s0 + $0x8] sm:$0xff]
  %v28 = vld [vmem:[%s0 + $0x10] sm:$0xff]
  %v29 = vld [vmem:[%s0 + $0x18] sm:$0xff]
  %v30 = vld [vmem:[%s0 + $0x20] sm:$0xff]
  %v31 = vld [vmem:[%s0 + $0x28] sm:$0xff]
  %v32 = vld [vmem:[%s0 + $0x30] sm:$0xff]
  %v33 = vld [vmem:[%s0 + $0x38] sm:$0xff]
  %v34 = vlaneseq
  %v35 = vshrl.u32 %v34, 7
  %v36 = vsub.s32 0, %v35
  %v37 = vrot.slane %v16, %v36
  %vm38 = vcmask 64512
  %v40 = vsel %vm38, %v26, 0
  %v43 = vsel %vm38, %v27, 0
  %v46 = vsel %vm38, %v28, 0
  %v49 = vsel %vm38, %v29, 0
  %v52 = vsel %vm38, %v30, 0
  %v55 = vsel %vm38, %v31, 0
  %v58 = vsel %vm38, %v32, 0
  %v61 = vsel %vm38, %v33, 0
  %63 = vmatprep.subr.mxu0 0.0
  %64 = vmatpush1.msra.mxu0 0.0
  %65 = vmatprep.subr.mxu0 0.0
  %66 = vmatpush1.msra.mxu0 0.0
  %67 = vmatprep.subr.mxu0 0.0
  %68 = vmatpush1.msra.mxu0 0.0
  %69 = vmatprep.subr.mxu0 0.0
  %70 = vmatpush1.msra.mxu0 0.0
  %71 = vmatprep.subr.mxu0 0.0
  %72 = vmatpush1.msra.mxu0 0.0
  %73 = vmatprep.subr.mxu0 0.0
  %74 = vmatpush1.msra.mxu0 0.0
  %75 = vmatprep.subr.mxu0 0.0
  %76 = vmatpush1.msra.mxu0 0.0
  %77 = vmatprep.subr.mxu0 0.0
  %78 = vmatpush1.msra.mxu0 0.0
  %79 = vmatprep.subr.mxu0 0.0
  %80 = vmatpush1.msra.mxu0 0.0
  %81 = vmatprep.subr.mxu0 0.0
  %82 = vmatpush1.msra.mxu0 0.0
  %83 = vmatprep.subr.mxu0 0.0
  %84 = vmatpush1.msra.mxu0 0.0
  %85 = vmatprep.subr.mxu0 0.0
  %86 = vmatpush1.msra.mxu0 0.0
  %87 = vmatprep.subr.mxu0 0.0
  %88 = vmatpush1.msra.mxu0 0.0
  %89 = vmatprep.subr.mxu0 0.0
  %90 = vmatpush1.msra.mxu0 0.0
  %91 = vmatprep.subr.mxu0 0.0
  %92 = vmatpush1.msra.mxu0 0.0
  %93 = vmatprep.subr.mxu0 0.0
  %94 = vmatpush1.msra.mxu0 %v11
  %95 = vmatprep.subr.mxu0 0.0
  %96 = vmatpush2.msra.mxu0 0.0
  %97 = vmatprep.subr.mxu0 0.0
  %98 = vmatpush2.msra.mxu0 0.0
  %99 = vmatprep.subr.mxu0 0.0
  %100 = vmatpush2.msra.mxu0 0.0
  %101 = vmatprep.subr.mxu0 0.0
  %102 = vmatpush2.msra.mxu0 0.0
  %103 = vmatprep.subr.mxu0 0.0
  %104 = vmatpush2.msra.mxu0 0.0
  %105 = vmatprep.subr.mxu0 0.0
  %106 = vmatpush2.msra.mxu0 0.0
  %107 = vmatprep.subr.mxu0 0.0
  %108 = vmatpush2.msra.mxu0 0.0
  %109 = vmatprep.subr.mxu0 0.0
  %110 = vmatpush2.msra.mxu0 0.0
  %111 = vmatprep.subr.mxu0 0.0
  %112 = vmatpush2.msra.mxu0 0.0
  %113 = vmatprep.subr.mxu0 0.0
  %114 = vmatpush2.msra.mxu0 0.0
  %115 = vmatprep.subr.mxu0 0.0
  %116 = vmatpush2.msra.mxu0 0.0
  %117 = vmatprep.subr.mxu0 0.0
  %118 = vmatpush2.msra.mxu0 0.0
  %119 = vmatprep.subr.mxu0 0.0
  %120 = vmatpush2.msra.mxu0 0.0
  %121 = vmatprep.subr.mxu0 0.0
  %122 = vmatpush2.msra.mxu0 0.0
  %123 = vmatprep.subr.mxu0 0.0
  %124 = vmatpush2.msra.mxu0 0.0
  %125 = vmatprep.subr.mxu0 0.0
  %126 = vmatpush2.msra.mxu0 0.0
  %127 = vmatprep.mubr.f32.mxu0 0.0
  %128 = vmatmul.mubr.f32.gmra.mxu0 %v40
  %v129 = vpop.f32.mrf.mxu0
  %v130 = vadd.f32 %v37, %v129
  %v131 = vpop.f32.mrf.mxu0
  %132 = vmatprep.mubr.f32.mxu0 0.0
  %133 = vmatmul.mubr.f32.gmra.mxu0 %v43
  %v134 = vpop.f32.mrf.mxu0
  %v135 = vadd.f32 %v37, %v134
  %v136 = vpop.f32.mrf.mxu0
  %137 = vmatprep.mubr.f32.mxu0 0.0
  %138 = vmatmul.mubr.f32.gmra.mxu0 %v46
  %v139 = vpop.f32.mrf.mxu0
  %v140 = vadd.f32 %v37, %v139
  %v141 = vpop.f32.mrf.mxu0
  %142 = vmatprep.mubr.f32.mxu0 0.0
  %143 = vmatmul.mubr.f32.gmra.mxu0 %v49
  %v144 = vpop.f32.mrf.mxu0
  %v145 = vadd.f32 %v37, %v144
  %v146 = vpop.f32.mrf.mxu0
  %147 = vmatprep.mubr.f32.mxu0 0.0
  %148 = vmatmul.mubr.f32.gmra.mxu0 %v52
  %v149 = vpop.f32.mrf.mxu0
  %v150 = vadd.f32 %v37, %v149
  %v151 = vpop.f32.mrf.mxu0
  %152 = vmatprep.mubr.f32.mxu0 0.0
  %153 = vmatmul.mubr.f32.gmra.mxu0 %v55
  %v154 = vpop.f32.mrf.mxu0
  %v155 = vadd.f32 %v37, %v154
  %v156 = vpop.f32.mrf.mxu0
  %157 = vmatprep.mubr.f32.mxu0 0.0
  %158 = vmatmul.mubr.f32.gmra.mxu0 %v58
  %v159 = vpop.f32.mrf.mxu0
  %v160 = vadd.f32 %v37, %v159
  %v161 = vpop.f32.mrf.mxu0
  %162 = vmatprep.mubr.f32.mxu0 0.0
  %163 = vmatmul.mubr.f32.gmra.mxu0 %v61
  %v164 = vpop.f32.mrf.mxu0
  %v165 = vadd.f32 %v37, %v164
  %v166 = vpop.f32.mrf.mxu0
  %167 = vdwg.mxu0
  %vm168 = vcmask 261120
  %v170 = vsel %vm168, 0.0, 0
  %172 = vmatprep.subr.mxu0 0.0
  %173 = vmatpush1.msra.mxu0 0.0
  %174 = vmatprep.subr.mxu0 0.0
  %175 = vmatpush1.msra.mxu0 0.0
  %176 = vmatprep.subr.mxu0 0.0
  %177 = vmatpush1.msra.mxu0 0.0
  %178 = vmatprep.subr.mxu0 0.0
  %179 = vmatpush1.msra.mxu0 0.0
  %180 = vmatprep.subr.mxu0 0.0
  %181 = vmatpush1.msra.mxu0 0.0
  %182 = vmatprep.subr.mxu0 0.0
  %183 = vmatpush1.msra.mxu0 0.0
  %184 = vmatprep.subr.mxu0 0.0
  %185 = vmatpush1.msra.mxu0 0.0
  %186 = vmatprep.subr.mxu0 0.0
  %187 = vmatpush1.msra.mxu0 0.0
  %188 = vmatprep.subr.mxu0 0.0
  %189 = vmatpush1.msra.mxu0 0.0
  %190 = vmatprep.subr.mxu0 0.0
  %191 = vmatpush1.msra.mxu0 0.0
  %192 = vmatprep.subr.mxu0 0.0
  %193 = vmatpush1.msra.mxu0 0.0
  %194 = vmatprep.subr.mxu0 0.0
  %195 = vmatpush1.msra.mxu0 0.0
  %196 = vmatprep.subr.mxu0 0.0
  %197 = vmatpush1.msra.mxu0 %v15
  %198 = vmatprep.subr.mxu0 0.0
  %199 = vmatpush1.msra.mxu0 %v14
  %200 = vmatprep.subr.mxu0 0.0
  %201 = vmatpush1.msra.mxu0 %v13
  %202 = vmatprep.subr.mxu0 0.0
  %203 = vmatpush1.msra.mxu0 %v12
  %204 = vmatprep.subr.mxu0 0.0
  %205 = vmatpush2.msra.mxu0 0.0
  %206 = vmatprep.subr.mxu0 0.0
  %207 = vmatpush2.msra.mxu0 0.0
  %208 = vmatprep.subr.mxu0 0.0
  %209 = vmatpush2.msra.mxu0 0.0
  %210 = vmatprep.subr.mxu0 0.0
  %211 = vmatpush2.msra.mxu0 0.0
  %212 = vmatprep.subr.mxu0 0.0
  %213 = vmatpush2.msra.mxu0 0.0
  %214 = vmatprep.subr.mxu0 0.0
  %215 = vmatpush2.msra.mxu0 0.0
  %216 = vmatprep.subr.mxu0 0.0
  %217 = vmatpush2.msra.mxu0 0.0
  %218 = vmatprep.subr.mxu0 0.0
  %219 = vmatpush2.msra.mxu0 0.0
  %220 = vmatprep.subr.mxu0 0.0
  %221 = vmatpush2.msra.mxu0 0.0
  %222 = vmatprep.subr.mxu0 0.0
  %223 = vmatpush2.msra.mxu0 0.0
  %224 = vmatprep.subr.mxu0 0.0
  %225 = vmatpush2.msra.mxu0 0.0
  %226 = vmatprep.subr.mxu0 0.0
  %227 = vmatpush2.msra.mxu0 0.0
  %228 = vmatprep.subr.mxu0 0.0
  %229 = vmatpush2.msra.mxu0 0.0
  %230 = vmatprep.subr.mxu0 0.0
  %231 = vmatpush2.msra.mxu0 0.0
  %232 = vmatprep.subr.mxu0 0.0
  %233 = vmatpush2.msra.mxu0 0.0
  %234 = vmatprep.subr.mxu0 0.0
  %235 = vmatpush2.msra.mxu0 0.0
  %236 = vmatprep.mubr.f32.mxu0 0.0
  %237 = vmatmul.mubr.f32.gmra.mxu0 %v170
  %v238 = vpop.f32.mrf.mxu0
  %v239 = vadd.f32 0.0, %v238
  %v240 = vpop.f32.mrf.mxu0
  %241 = vdwg.mxu0
  %v242 = vadd.f32 %v130, %v239
  %v243 = vxor.u32 %v242, 2147483648
  %v244 = vmul.f32 %v243, 1.442695
  %v245 = vpow.pop %v244
  %v246 = vadd.f32 %v245, 1.0
  %v247 = vrcp.pop %v246
  %v248 = vmul.f32 1.0, %v247
  %v249 = vtanh.pop %v242
  %v250 = vmul.f32 %v248, 0.0
  %252 = vrot.lane.b32.xlu0 %v249, 64
  %v253 = vpop.permute.xlu0 %252
  %v255 = vmul.f32 %v248, %v253
  %257 = vrot.lane.b32.xlu0 %v255, 32
  %v258 = vpop.permute.xlu0 %257
  %v260 = vadd.f32 %v250, %v258
  %v261 = vtanh.pop %v260
  %263 = vrot.lane.b32.xlu0 %v261, 64
  %v264 = vpop.permute.xlu0 %263
  %v266 = vmul.f32 %v248, %v264
  %267 = vmatprep.subr.mxu0 0.0
  %268 = vmatpush1.msra.mxu0 0.0
  %269 = vmatprep.subr.mxu0 0.0
  %270 = vmatpush1.msra.mxu0 0.0
  %271 = vmatprep.subr.mxu0 0.0
  %272 = vmatpush1.msra.mxu0 0.0
  %273 = vmatprep.subr.mxu0 0.0
  %274 = vmatpush1.msra.mxu0 0.0
  %275 = vmatprep.subr.mxu0 0.0
  %276 = vmatpush1.msra.mxu0 0.0
  %277 = vmatprep.subr.mxu0 0.0
  %278 = vmatpush1.msra.mxu0 0.0
  %279 = vmatprep.subr.mxu0 0.0
  %280 = vmatpush1.msra.mxu0 0.0
  %281 = vmatprep.subr.mxu0 0.0
  %282 = vmatpush1.msra.mxu0 0.0
  %283 = vmatprep.subr.mxu0 0.0
  %284 = vmatpush1.msra.mxu0 0.0
  %285 = vmatprep.subr.mxu0 0.0
  %286 = vmatpush1.msra.mxu0 0.0
  %287 = vmatprep.subr.mxu0 0.0
  %288 = vmatpush1.msra.mxu0 0.0
  %289 = vmatprep.subr.mxu0 0.0
  %290 = vmatpush1.msra.mxu0 0.0
  %291 = vmatprep.subr.mxu0 0.0
  %292 = vmatpush1.msra.mxu0 %v24
  %293 = vmatprep.subr.mxu0 0.0
  %294 = vmatpush1.msra.mxu0 %v23
  %295 = vmatprep.subr.mxu0 0.0
  %296 = vmatpush1.msra.mxu0 %v22
  %297 = vmatprep.subr.mxu0 0.0
  %298 = vmatpush1.msra.mxu0 %v21
  %299 = vmatprep.subr.mxu0 0.0
  %300 = vmatpush2.msra.mxu0 0.0
  %301 = vmatprep.subr.mxu0 0.0
  %302 = vmatpush2.msra.mxu0 0.0
  %303 = vmatprep.subr.mxu0 0.0
  %304 = vmatpush2.msra.mxu0 0.0
  %305 = vmatprep.subr.mxu0 0.0
  %306 = vmatpush2.msra.mxu0 0.0
  %307 = vmatprep.subr.mxu0 0.0
  %308 = vmatpush2.msra.mxu0 0.0
  %309 = vmatprep.subr.mxu0 0.0
  %310 = vmatpush2.msra.mxu0 0.0
  %311 = vmatprep.subr.mxu0 0.0
  %312 = vmatpush2.msra.mxu0 0.0
  %313 = vmatprep.subr.mxu0 0.0
  %314 = vmatpush2.msra.mxu0 0.0
  %315 = vmatprep.subr.mxu0 0.0
  %316 = vmatpush2.msra.mxu0 0.0
  %317 = vmatprep.subr.mxu0 0.0
  %318 = vmatpush2.msra.mxu0 0.0
  %319 = vmatprep.subr.mxu0 0.0
  %320 = vmatpush2.msra.mxu0 0.0
  %321 = vmatprep.subr.mxu0 0.0
  %322 = vmatpush2.msra.mxu0 0.0
  %323 = vmatprep.subr.mxu0 0.0
  %324 = vmatpush2.msra.mxu0 0.0
  %325 = vmatprep.subr.mxu0 0.0
  %326 = vmatpush2.msra.mxu0 0.0
  %327 = vmatprep.subr.mxu0 0.0
  %328 = vmatpush2.msra.mxu0 0.0
  %329 = vmatprep.subr.mxu0 0.0
  %330 = vmatpush2.msra.mxu0 0.0
  %331 = vmatprep.mubr.f32.mxu0 0.0
  %332 = vmatmul.mubr.f32.gmra.mxu0 %v170
  %v333 = vpop.f32.mrf.mxu0
  %v334 = vadd.f32 0.0, %v333
  %v335 = vpop.f32.mrf.mxu0
  %336 = vdwg.mxu0
  %338 = vrot.lane.b32.xlu0 %v266, 32
  %v339 = vpop.permute.xlu0 %338
  %v340 = vsel %vm168, %v339, 0
  %342 = vmatprep.subr.mxu0 0.0
  %343 = vmatpush1.msra.mxu0 0.0
  %344 = vmatprep.subr.mxu0 0.0
  %345 = vmatpush1.msra.mxu0 0.0
  %346 = vmatprep.subr.mxu0 0.0
  %347 = vmatpush1.msra.mxu0 0.0
  %348 = vmatprep.subr.mxu0 0.0
  %349 = vmatpush1.msra.mxu0 0.0
  %350 = vmatprep.subr.mxu0 0.0
  %351 = vmatpush1.msra.mxu0 0.0
  %352 = vmatprep.subr.mxu0 0.0
  %353 = vmatpush1.msra.mxu0 0.0
  %354 = vmatprep.subr.mxu0 0.0
  %355 = vmatpush1.msra.mxu0 0.0
  %356 = vmatprep.subr.mxu0 0.0
  %357 = vmatpush1.msra.mxu0 0.0
  %358 = vmatprep.subr.mxu0 0.0
  %359 = vmatpush1.msra.mxu0 0.0
  %360 = vmatprep.subr.mxu0 0.0
  %361 = vmatpush1.msra.mxu0 0.0
  %362 = vmatprep.subr.mxu0 0.0
  %363 = vmatpush1.msra.mxu0 0.0
  %364 = vmatprep.subr.mxu0 0.0
  %365 = vmatpush1.msra.mxu0 0.0
  %366 = vmatprep.subr.mxu0 0.0
  %367 = vmatpush1.msra.mxu0 %v20
  %368 = vmatprep.subr.mxu0 0.0
  %369 = vmatpush1.msra.mxu0 %v19
  %370 = vmatprep.subr.mxu0 0.0
  %371 = vmatpush1.msra.mxu0 %v18
  %372 = vmatprep.subr.mxu0 0.0
  %373 = vmatpush1.msra.mxu0 %v17
  %374 = vmatprep.subr.mxu0 0.0
  %375 = vmatpush2.msra.mxu0 0.0
  %376 = vmatprep.subr.mxu0 0.0
  %377 = vmatpush2.msra.mxu0 0.0
  %378 = vmatprep.subr.mxu0 0.0
  %379 = vmatpush2.msra.mxu0 0.0
  %380 = vmatprep.subr.mxu0 0.0
  %381 = vmatpush2.msra.mxu0 0.0
  %382 = vmatprep.subr.mxu0 0.0
  %383 = vmatpush2.msra.mxu0 0.0
  %384 = vmatprep.subr.mxu0 0.0
  %385 = vmatpush2.msra.mxu0 0.0
  %386 = vmatprep.subr.mxu0 0.0
  %387 = vmatpush2.msra.mxu0 0.0
  %388 = vmatprep.subr.mxu0 0.0
  %389 = vmatpush2.msra.mxu0 0.0
  %390 = vmatprep.subr.mxu0 0.0
  %391 = vmatpush2.msra.mxu0 0.0
  %392 = vmatprep.subr.mxu0 0.0
  %393 = vmatpush2.msra.mxu0 0.0
  %394 = vmatprep.subr.mxu0 0.0
  %395 = vmatpush2.msra.mxu0 0.0
  %396 = vmatprep.subr.mxu0 0.0
  %397 = vmatpush2.msra.mxu0 0.0
  %398 = vmatprep.subr.mxu0 0.0
  %399 = vmatpush2.msra.mxu0 0.0
  %400 = vmatprep.subr.mxu0 0.0
  %401 = vmatpush2.msra.mxu0 0.0
  %402 = vmatprep.subr.mxu0 0.0
  %403 = vmatpush2.msra.mxu0 0.0
  %404 = vmatprep.subr.mxu0 0.0
  %405 = vmatpush2.msra.mxu0 0.0
  %406 = vmatprep.mubr.f32.mxu0 0.0
  %407 = vmatmul.mubr.f32.gmra.mxu0 %v340
  %v408 = vpop.f32.mrf.mxu0
  %v409 = vadd.f32 %v334, %v408
  %v410 = vpop.f32.mrf.mxu0
  %411 = vdwg.mxu0
  %v412 = vlaneseq
  %v413 = vshrl.u32 %v412, 7
  %v414 = vsub.s32 0, %v413
  %v415 = vrot.slane %v25, %v414
  %v416 = vadd.f32 %v409, %v415
  %v417 = vxor.u32 %v416, 2147483648
  %v418 = vmul.f32 %v417, 1.442695
  %v419 = vpow.pop %v418
  %v420 = vadd.f32 %v419, 1.0
  %v421 = vrcp.pop %v420
  %v422 = vmul.f32 1.0, %v421
  %v423 = vtanh.pop %v416
  %v424 = vmul.f32 %v422, 0.0
  %426 = vrot.lane.b32.xlu0 %v423, 64
  %v427 = vpop.permute.xlu0 %426
  %v429 = vmul.f32 %v422, %v427
  %431 = vrot.lane.b32.xlu0 %v429, 32
  %v432 = vpop.permute.xlu0 %431
  %v434 = vadd.f32 %v424, %v432
  %v435 = vtanh.pop %v434
  %437 = vrot.lane.b32.xlu0 %v435, 64
  %v438 = vpop.permute.xlu0 %437
  %v440 = vmul.f32 %v422, %v438
  %441 = vmatprep.subr.mxu0 0.0
  %442 = vmatpush1.msra.mxu0 0.0
  %443 = vmatprep.subr.mxu0 0.0
  %444 = vmatpush1.msra.mxu0 0.0
  %445 = vmatprep.subr.mxu0 0.0
  %446 = vmatpush1.msra.mxu0 0.0
  %447 = vmatprep.subr.mxu0 0.0
  %448 = vmatpush1.msra.mxu0 0.0
  %449 = vmatprep.subr.mxu0 0.0
  %450 = vmatpush1.msra.mxu0 0.0
  %451 = vmatprep.subr.mxu0 0.0
  %452 = vmatpush1.msra.mxu0 0.0
  %453 = vmatprep.subr.mxu0 0.0
  %454 = vmatpush1.msra.mxu0 0.0
  %455 = vmatprep.subr.mxu0 0.0
  %456 = vmatpush1.msra.mxu0 0.0
  %457 = vmatprep.subr.mxu0 0.0
  %458 = vmatpush1.msra.mxu0 0.0
  %459 = vmatprep.subr.mxu0 0.0
  %460 = vmatpush1.msra.mxu0 0.0
  %461 = vmatprep.subr.mxu0 0.0
  %462 = vmatpush1.msra.mxu0 0.0
  %463 = vmatprep.subr.mxu0 0.0
  %464 = vmatpush1.msra.mxu0 0.0
  %465 = vmatprep.subr.mxu0 0.0
  %466 = vmatpush1.msra.mxu0 %v15
  %467 = vmatprep.subr.mxu0 0.0
  %468 = vmatpush1.msra.mxu0 %v14
  %469 = vmatprep.subr.mxu0 0.0
  %470 = vmatpush1.msra.mxu0 %v13
  %471 = vmatprep.subr.mxu0 0.0
  %472 = vmatpush1.msra.mxu0 %v12
  %473 = vmatprep.subr.mxu0 0.0
  %474 = vmatpush2.msra.mxu0 0.0
  %475 = vmatprep.subr.mxu0 0.0
  %476 = vmatpush2.msra.mxu0 0.0
  %477 = vmatprep.subr.mxu0 0.0
  %478 = vmatpush2.msra.mxu0 0.0
  %479 = vmatprep.subr.mxu0 0.0
  %480 = vmatpush2.msra.mxu0 0.0
  %481 = vmatprep.subr.mxu0 0.0
  %482 = vmatpush2.msra.mxu0 0.0
  %483 = vmatprep.subr.mxu0 0.0
  %484 = vmatpush2.msra.mxu0 0.0
  %485 = vmatprep.subr.mxu0 0.0
  %486 = vmatpush2.msra.mxu0 0.0
  %487 = vmatprep.subr.mxu0 0.0
  %488 = vmatpush2.msra.mxu0 0.0
  %489 = vmatprep.subr.mxu0 0.0
  %490 = vmatpush2.msra.mxu0 0.0
  %491 = vmatprep.subr.mxu0 0.0
  %492 = vmatpush2.msra.mxu0 0.0
  %493 = vmatprep.subr.mxu0 0.0
  %494 = vmatpush2.msra.mxu0 0.0
  %495 = vmatprep.subr.mxu0 0.0
  %496 = vmatpush2.msra.mxu0 0.0
  %497 = vmatprep.subr.mxu0 0.0
  %498 = vmatpush2.msra.mxu0 0.0
  %499 = vmatprep.subr.mxu0 0.0
  %500 = vmatpush2.msra.mxu0 0.0
  %501 = vmatprep.subr.mxu0 0.0
  %502 = vmatpush2.msra.mxu0 0.0
  %503 = vmatprep.subr.mxu0 0.0
  %504 = vmatpush2.msra.mxu0 0.0
  %505 = vmatprep.mubr.f32.mxu0 0.0
  %506 = vmatmul.mubr.f32.gmra.mxu0 %v340
  %v507 = vpop.f32.mrf.mxu0
  %v508 = vadd.f32 0.0, %v507
  %v509 = vpop.f32.mrf.mxu0
  %510 = vdwg.mxu0
  %v511 = vadd.f32 %v135, %v508
  %v512 = vxor.u32 %v511, 2147483648
  %v513 = vmul.f32 %v512, 1.442695
  %v514 = vpow.pop %v513
  %v515 = vadd.f32 %v514, 1.0
  %v516 = vrcp.pop %v515
  %v517 = vmul.f32 1.0, %v516
  %v518 = vtanh.pop %v511
  %v519 = vmul.f32 %v517, %v260
  %521 = vrot.lane.b32.xlu0 %v518, 64
  %v522 = vpop.permute.xlu0 %521
  %v524 = vmul.f32 %v517, %v522
  %526 = vrot.lane.b32.xlu0 %v524, 32
  %v527 = vpop.permute.xlu0 %526
  %v529 = vadd.f32 %v519, %v527
  %v530 = vtanh.pop %v529
  %532 = vrot.lane.b32.xlu0 %v530, 64
  %v533 = vpop.permute.xlu0 %532
  %v535 = vmul.f32 %v517, %v533
  %537 = vrot.lane.b32.xlu0 %v440, 32
  %v538 = vpop.permute.xlu0 %537
  %v539 = vsel %vm168, %v538, 0
  %541 = vmatprep.subr.mxu0 0.0
  %542 = vmatpush1.msra.mxu0 0.0
  %543 = vmatprep.subr.mxu0 0.0
  %544 = vmatpush1.msra.mxu0 0.0
  %545 = vmatprep.subr.mxu0 0.0
  %546 = vmatpush1.msra.mxu0 0.0
  %547 = vmatprep.subr.mxu0 0.0
  %548 = vmatpush1.msra.mxu0 0.0
  %549 = vmatprep.subr.mxu0 0.0
  %550 = vmatpush1.msra.mxu0 0.0
  %551 = vmatprep.subr.mxu0 0.0
  %552 = vmatpush1.msra.mxu0 0.0
  %553 = vmatprep.subr.mxu0 0.0
  %554 = vmatpush1.msra.mxu0 0.0
  %555 = vmatprep.subr.mxu0 0.0
  %556 = vmatpush1.msra.mxu0 0.0
  %557 = vmatprep.subr.mxu0 0.0
  %558 = vmatpush1.msra.mxu0 0.0
  %559 = vmatprep.subr.mxu0 0.0
  %560 = vmatpush1.msra.mxu0 0.0
  %561 = vmatprep.subr.mxu0 0.0
  %562 = vmatpush1.msra.mxu0 0.0
  %563 = vmatprep.subr.mxu0 0.0
  %564 = vmatpush1.msra.mxu0 0.0
  %565 = vmatprep.subr.mxu0 0.0
  %566 = vmatpush1.msra.mxu0 %v24
  %567 = vmatprep.subr.mxu0 0.0
  %568 = vmatpush1.msra.mxu0 %v23
  %569 = vmatprep.subr.mxu0 0.0
  %570 = vmatpush1.msra.mxu0 %v22
  %571 = vmatprep.subr.mxu0 0.0
  %572 = vmatpush1.msra.mxu0 %v21
  %573 = vmatprep.subr.mxu0 0.0
  %574 = vmatpush2.msra.mxu0 0.0
  %575 = vmatprep.subr.mxu0 0.0
  %576 = vmatpush2.msra.mxu0 0.0
  %577 = vmatprep.subr.mxu0 0.0
  %578 = vmatpush2.msra.mxu0 0.0
  %579 = vmatprep.subr.mxu0 0.0
  %580 = vmatpush2.msra.mxu0 0.0
  %581 = vmatprep.subr.mxu0 0.0
  %582 = vmatpush2.msra.mxu0 0.0
  %583 = vmatprep.subr.mxu0 0.0
  %584 = vmatpush2.msra.mxu0 0.0
  %585 = vmatprep.subr.mxu0 0.0
  %586 = vmatpush2.msra.mxu0 0.0
  %587 = vmatprep.subr.mxu0 0.0
  %588 = vmatpush2.msra.mxu0 0.0
  %589 = vmatprep.subr.mxu0 0.0
  %590 = vmatpush2.msra.mxu0 0.0
  %591 = vmatprep.subr.mxu0 0.0
  %592 = vmatpush2.msra.mxu0 0.0
  %593 = vmatprep.subr.mxu0 0.0
  %594 = vmatpush2.msra.mxu0 0.0
  %595 = vmatprep.subr.mxu0 0.0
  %596 = vmatpush2.msra.mxu0 0.0
  %597 = vmatprep.subr.mxu0 0.0
  %598 = vmatpush2.msra.mxu0 0.0
  %599 = vmatprep.subr.mxu0 0.0
  %600 = vmatpush2.msra.mxu0 0.0
  %601 = vmatprep.subr.mxu0 0.0
  %602 = vmatpush2.msra.mxu0 0.0
  %603 = vmatprep.subr.mxu0 0.0
  %604 = vmatpush2.msra.mxu0 0.0
  %605 = vmatprep.mubr.f32.mxu0 0.0
  %606 = vmatmul.mubr.f32.gmra.mxu0 %v539
  %v607 = vpop.f32.mrf.mxu0
  %v608 = vadd.f32 0.0, %v607
  %v609 = vpop.f32.mrf.mxu0
  %610 = vdwg.mxu0
  %612 = vrot.lane.b32.xlu0 %v535, 32
  %v613 = vpop.permute.xlu0 %612
  %v614 = vsel %vm168, %v613, 0
  %616 = vmatprep.subr.mxu0 0.0
  %617 = vmatpush1.msra.mxu0 0.0
  %618 = vmatprep.subr.mxu0 0.0
  %619 = vmatpush1.msra.mxu0 0.0
  %620 = vmatprep.subr.mxu0 0.0
  %621 = vmatpush1.msra.mxu0 0.0
  %622 = vmatprep.subr.mxu0 0.0
  %623 = vmatpush1.msra.mxu0 0.0
  %624 = vmatprep.subr.mxu0 0.0
  %625 = vmatpush1.msra.mxu0 0.0
  %626 = vmatprep.subr.mxu0 0.0
  %627 = vmatpush1.msra.mxu0 0.0
  %628 = vmatprep.subr.mxu0 0.0
  %629 = vmatpush1.msra.mxu0 0.0
  %630 = vmatprep.subr.mxu0 0.0
  %631 = vmatpush1.msra.mxu0 0.0
  %632 = vmatprep.subr.mxu0 0.0
  %633 = vmatpush1.msra.mxu0 0.0
  %634 = vmatprep.subr.mxu0 0.0
  %635 = vmatpush1.msra.mxu0 0.0
  %636 = vmatprep.subr.mxu0 0.0
  %637 = vmatpush1.msra.mxu0 0.0
  %638 = vmatprep.subr.mxu0 0.0
  %639 = vmatpush1.msra.mxu0 0.0
  %640 = vmatprep.subr.mxu0 0.0
  %641 = vmatpush1.msra.mxu0 %v20
  %642 = vmatprep.subr.mxu0 0.0
  %643 = vmatpush1.msra.mxu0 %v19
  %644 = vmatprep.subr.mxu0 0.0
  %645 = vmatpush1.msra.mxu0 %v18
  %646 = vmatprep.subr.mxu0 0.0
  %647 = vmatpush1.msra.mxu0 %v17
  %648 = vmatprep.subr.mxu0 0.0
  %649 = vmatpush2.msra.mxu0 0.0
  %650 = vmatprep.subr.mxu0 0.0
  %651 = vmatpush2.msra.mxu0 0.0
  %652 = vmatprep.subr.mxu0 0.0
  %653 = vmatpush2.msra.mxu0 0.0
  %654 = vmatprep.subr.mxu0 0.0
  %655 = vmatpush2.msra.mxu0 0.0
  %656 = vmatprep.subr.mxu0 0.0
  %657 = vmatpush2.msra.mxu0 0.0
  %658 = vmatprep.subr.mxu0 0.0
  %659 = vmatpush2.msra.mxu0 0.0
  %660 = vmatprep.subr.mxu0 0.0
  %661 = vmatpush2.msra.mxu0 0.0
  %662 = vmatprep.subr.mxu0 0.0
  %663 = vmatpush2.msra.mxu0 0.0
  %664 = vmatprep.subr.mxu0 0.0
  %665 = vmatpush2.msra.mxu0 0.0
  %666 = vmatprep.subr.mxu0 0.0
  %667 = vmatpush2.msra.mxu0 0.0
  %668 = vmatprep.subr.mxu0 0.0
  %669 = vmatpush2.msra.mxu0 0.0
  %670 = vmatprep.subr.mxu0 0.0
  %671 = vmatpush2.msra.mxu0 0.0
  %672 = vmatprep.subr.mxu0 0.0
  %673 = vmatpush2.msra.mxu0 0.0
  %674 = vmatprep.subr.mxu0 0.0
  %675 = vmatpush2.msra.mxu0 0.0
  %676 = vmatprep.subr.mxu0 0.0
  %677 = vmatpush2.msra.mxu0 0.0
  %678 = vmatprep.subr.mxu0 0.0
  %679 = vmatpush2.msra.mxu0 0.0
  %680 = vmatprep.mubr.f32.mxu0 0.0
  %681 = vmatmul.mubr.f32.gmra.mxu0 %v614
  %v682 = vpop.f32.mrf.mxu0
  %v683 = vadd.f32 %v608, %v682
  %v684 = vpop.f32.mrf.mxu0
  %685 = vdwg.mxu0
  %v686 = vadd.f32 %v683, %v415
  %v687 = vxor.u32 %v686, 2147483648
  %v688 = vmul.f32 %v687, 1.442695
  %v689 = vpow.pop %v688
  %v690 = vadd.f32 %v689, 1.0
  %v691 = vrcp.pop %v690
  %v692 = vmul.f32 1.0, %v691
  %v693 = vtanh.pop %v686
  %v694 = vmul.f32 %v692, %v434
  %696 = vrot.lane.b32.xlu0 %v693, 64
  %v697 = vpop.permute.xlu0 %696
  %v699 = vmul.f32 %v692, %v697
  %701 = vrot.lane.b32.xlu0 %v699, 32
  %v702 = vpop.permute.xlu0 %701
  %v704 = vadd.f32 %v694, %v702
  %v705 = vtanh.pop %v704
  %707 = vrot.lane.b32.xlu0 %v705, 64
  %v708 = vpop.permute.xlu0 %707
  %v710 = vmul.f32 %v692, %v708
  %711 = vmatprep.subr.mxu0 0.0
  %712 = vmatpush1.msra.mxu0 0.0
  %713 = vmatprep.subr.mxu0 0.0
  %714 = vmatpush1.msra.mxu0 0.0
  %715 = vmatprep.subr.mxu0 0.0
  %716 = vmatpush1.msra.mxu0 0.0
  %717 = vmatprep.subr.mxu0 0.0
  %718 = vmatpush1.msra.mxu0 0.0
  %719 = vmatprep.subr.mxu0 0.0
  %720 = vmatpush1.msra.mxu0 0.0
  %721 = vmatprep.subr.mxu0 0.0
  %722 = vmatpush1.msra.mxu0 0.0
  %723 = vmatprep.subr.mxu0 0.0
  %724 = vmatpush1.msra.mxu0 0.0
  %725 = vmatprep.subr.mxu0 0.0
  %726 = vmatpush1.msra.mxu0 0.0
  %727 = vmatprep.subr.mxu0 0.0
  %728 = vmatpush1.msra.mxu0 0.0
  %729 = vmatprep.subr.mxu0 0.0
  %730 = vmatpush1.msra.mxu0 0.0
  %731 = vmatprep.subr.mxu0 0.0
  %732 = vmatpush1.msra.mxu0 0.0
  %733 = vmatprep.subr.mxu0 0.0
  %734 = vmatpush1.msra.mxu0 0.0
  %735 = vmatprep.subr.mxu0 0.0
  %736 = vmatpush1.msra.mxu0 %v15
  %737 = vmatprep.subr.mxu0 0.0
  %738 = vmatpush1.msra.mxu0 %v14
  %739 = vmatprep.subr.mxu0 0.0
  %740 = vmatpush1.msra.mxu0 %v13
  %741 = vmatprep.subr.mxu0 0.0
  %742 = vmatpush1.msra.mxu0 %v12
  %743 = vmatprep.subr.mxu0 0.0
  %744 = vmatpush2.msra.mxu0 0.0
  %745 = vmatprep.subr.mxu0 0.0
  %746 = vmatpush2.msra.mxu0 0.0
  %747 = vmatprep.subr.mxu0 0.0
  %748 = vmatpush2.msra.mxu0 0.0
  %749 = vmatprep.subr.mxu0 0.0
  %750 = vmatpush2.msra.mxu0 0.0
  %751 = vmatprep.subr.mxu0 0.0
  %752 = vmatpush2.msra.mxu0 0.0
  %753 = vmatprep.subr.mxu0 0.0
  %754 = vmatpush2.msra.mxu0 0.0
  %755 = vmatprep.subr.mxu0 0.0
  %756 = vmatpush2.msra.mxu0 0.0
  %757 = vmatprep.subr.mxu0 0.0
  %758 = vmatpush2.msra.mxu0 0.0
  %759 = vmatprep.subr.mxu0 0.0
  %760 = vmatpush2.msra.mxu0 0.0
  %761 = vmatprep.subr.mxu0 0.0
  %762 = vmatpush2.msra.mxu0 0.0
  %763 = vmatprep.subr.mxu0 0.0
  %764 = vmatpush2.msra.mxu0 0.0
  %765 = vmatprep.subr.mxu0 0.0
  %766 = vmatpush2.msra.mxu0 0.0
  %767 = vmatprep.subr.mxu0 0.0
  %768 = vmatpush2.msra.mxu0 0.0
  %769 = vmatprep.subr.mxu0 0.0
  %770 = vmatpush2.msra.mxu0 0.0
  %771 = vmatprep.subr.mxu0 0.0
  %772 = vmatpush2.msra.mxu0 0.0
  %773 = vmatprep.subr.mxu0 0.0
  %774 = vmatpush2.msra.mxu0 0.0
  %775 = vmatprep.mubr.f32.mxu0 0.0
  %776 = vmatmul.mubr.f32.gmra.mxu0 %v614
  %v777 = vpop.f32.mrf.mxu0
  %v778 = vadd.f32 0.0, %v777
  %v779 = vpop.f32.mrf.mxu0
  %780 = vdwg.mxu0
  %v781 = vadd.f32 %v140, %v778
  %v782 = vxor.u32 %v781, 2147483648
  %v783 = vmul.f32 %v782, 1.442695
  %v784 = vpow.pop %v783
  %v785 = vadd.f32 %v784, 1.0
  %v786 = vrcp.pop %v785
  %v787 = vmul.f32 1.0, %v786
  %v788 = vtanh.pop %v781
  %v789 = vmul.f32 %v787, %v529
  %791 = vrot.lane.b32.xlu0 %v788, 64
  %v792 = vpop.permute.xlu0 %791
  %v794 = vmul.f32 %v787, %v792
  %796 = vrot.lane.b32.xlu0 %v794, 32
  %v797 = vpop.permute.xlu0 %796
  %v799 = vadd.f32 %v789, %v797
  %v800 = vtanh.pop %v799
  %802 = vrot.lane.b32.xlu0 %v800, 64
  %v803 = vpop.permute.xlu0 %802
  %v805 = vmul.f32 %v787, %v803
  %807 = vrot.lane.b32.xlu0 %v710, 32
  %v808 = vpop.permute.xlu0 %807
  %v809 = vsel %vm168, %v808, 0
  %811 = vmatprep.subr.mxu0 0.0
  %812 = vmatpush1.msra.mxu0 0.0
  %813 = vmatprep.subr.mxu0 0.0
  %814 = vmatpush1.msra.mxu0 0.0
  %815 = vmatprep.subr.mxu0 0.0
  %816 = vmatpush1.msra.mxu0 0.0
  %817 = vmatprep.subr.mxu0 0.0
  %818 = vmatpush1.msra.mxu0 0.0
  %819 = vmatprep.subr.mxu0 0.0
  %820 = vmatpush1.msra.mxu0 0.0
  %821 = vmatprep.subr.mxu0 0.0
  %822 = vmatpush1.msra.mxu0 0.0
  %823 = vmatprep.subr.mxu0 0.0
  %824 = vmatpush1.msra.mxu0 0.0
  %825 = vmatprep.subr.mxu0 0.0
  %826 = vmatpush1.msra.mxu0 0.0
  %827 = vmatprep.subr.mxu0 0.0
  %828 = vmatpush1.msra.mxu0 0.0
  %829 = vmatprep.subr.mxu0 0.0
  %830 = vmatpush1.msra.mxu0 0.0
  %831 = vmatprep.subr.mxu0 0.0
  %832 = vmatpush1.msra.mxu0 0.0
  %833 = vmatprep.subr.mxu0 0.0
  %834 = vmatpush1.msra.mxu0 0.0
  %835 = vmatprep.subr.mxu0 0.0
  %836 = vmatpush1.msra.mxu0 %v24
  %837 = vmatprep.subr.mxu0 0.0
  %838 = vmatpush1.msra.mxu0 %v23
  %839 = vmatprep.subr.mxu0 0.0
  %840 = vmatpush1.msra.mxu0 %v22
  %841 = vmatprep.subr.mxu0 0.0
  %842 = vmatpush1.msra.mxu0 %v21
  %843 = vmatprep.subr.mxu0 0.0
  %844 = vmatpush2.msra.mxu0 0.0
  %845 = vmatprep.subr.mxu0 0.0
  %846 = vmatpush2.msra.mxu0 0.0
  %847 = vmatprep.subr.mxu0 0.0
  %848 = vmatpush2.msra.mxu0 0.0
  %849 = vmatprep.subr.mxu0 0.0
  %850 = vmatpush2.msra.mxu0 0.0
  %851 = vmatprep.subr.mxu0 0.0
  %852 = vmatpush2.msra.mxu0 0.0
  %853 = vmatprep.subr.mxu0 0.0
  %854 = vmatpush2.msra.mxu0 0.0
  %855 = vmatprep.subr.mxu0 0.0
  %856 = vmatpush2.msra.mxu0 0.0
  %857 = vmatprep.subr.mxu0 0.0
  %858 = vmatpush2.msra.mxu0 0.0
  %859 = vmatprep.subr.mxu0 0.0
  %860 = vmatpush2.msra.mxu0 0.0
  %861 = vmatprep.subr.mxu0 0.0
  %862 = vmatpush2.msra.mxu0 0.0
  %863 = vmatprep.subr.mxu0 0.0
  %864 = vmatpush2.msra.mxu0 0.0
  %865 = vmatprep.subr.mxu0 0.0
  %866 = vmatpush2.msra.mxu0 0.0
  %867 = vmatprep.subr.mxu0 0.0
  %868 = vmatpush2.msra.mxu0 0.0
  %869 = vmatprep.subr.mxu0 0.0
  %870 = vmatpush2.msra.mxu0 0.0
  %871 = vmatprep.subr.mxu0 0.0
  %872 = vmatpush2.msra.mxu0 0.0
  %873 = vmatprep.subr.mxu0 0.0
  %874 = vmatpush2.msra.mxu0 0.0
  %875 = vmatprep.mubr.f32.mxu0 0.0
  %876 = vmatmul.mubr.f32.gmra.mxu0 %v809
  %v877 = vpop.f32.mrf.mxu0
  %v878 = vadd.f32 0.0, %v877
  %v879 = vpop.f32.mrf.mxu0
  %880 = vdwg.mxu0
  %882 = vrot.lane.b32.xlu0 %v805, 32
  %v883 = vpop.permute.xlu0 %882
  %v884 = vsel %vm168, %v883, 0
  %886 = vmatprep.subr.mxu0 0.0
  %887 = vmatpush1.msra.mxu0 0.0
  %888 = vmatprep.subr.mxu0 0.0
  %889 = vmatpush1.msra.mxu0 0.0
  %890 = vmatprep.subr.mxu0 0.0
  %891 = vmatpush1.msra.mxu0 0.0
  %892 = vmatprep.subr.mxu0 0.0
  %893 = vmatpush1.msra.mxu0 0.0
  %894 = vmatprep.subr.mxu0 0.0
  %895 = vmatpush1.msra.mxu0 0.0
  %896 = vmatprep.subr.mxu0 0.0
  %897 = vmatpush1.msra.mxu0 0.0
  %898 = vmatprep.subr.mxu0 0.0
  %899 = vmatpush1.msra.mxu0 0.0
  %900 = vmatprep.subr.mxu0 0.0
  %901 = vmatpush1.msra.mxu0 0.0
  %902 = vmatprep.subr.mxu0 0.0
  %903 = vmatpush1.msra.mxu0 0.0
  %904 = vmatprep.subr.mxu0 0.0
  %905 = vmatpush1.msra.mxu0 0.0
  %906 = vmatprep.subr.mxu0 0.0
  %907 = vmatpush1.msra.mxu0 0.0
  %908 = vmatprep.subr.mxu0 0.0
  %909 = vmatpush1.msra.mxu0 0.0
  %910 = vmatprep.subr.mxu0 0.0
  %911 = vmatpush1.msra.mxu0 %v20
  %912 = vmatprep.subr.mxu0 0.0
  %913 = vmatpush1.msra.mxu0 %v19
  %914 = vmatprep.subr.mxu0 0.0
  %915 = vmatpush1.msra.mxu0 %v18
  %916 = vmatprep.subr.mxu0 0.0
  %917 = vmatpush1.msra.mxu0 %v17
  %918 = vmatprep.subr.mxu0 0.0
  %919 = vmatpush2.msra.mxu0 0.0
  %920 = vmatprep.subr.mxu0 0.0
  %921 = vmatpush2.msra.mxu0 0.0
  %922 = vmatprep.subr.mxu0 0.0
  %923 = vmatpush2.msra.mxu0 0.0
  %924 = vmatprep.subr.mxu0 0.0
  %925 = vmatpush2.msra.mxu0 0.0
  %926 = vmatprep.subr.mxu0 0.0
  %927 = vmatpush2.msra.mxu0 0.0
  %928 = vmatprep.subr.mxu0 0.0
  %929 = vmatpush2.msra.mxu0 0.0
  %930 = vmatprep.subr.mxu0 0.0
  %931 = vmatpush2.msra.mxu0 0.0
  %932 = vmatprep.subr.mxu0 0.0
  %933 = vmatpush2.msra.mxu0 0.0
  %934 = vmatprep.subr.mxu0 0.0
  %935 = vmatpush2.msra.mxu0 0.0
  %936 = vmatprep.subr.mxu0 0.0
  %937 = vmatpush2.msra.mxu0 0.0
  %938 = vmatprep.subr.mxu0 0.0
  %939 = vmatpush2.msra.mxu0 0.0
  %940 = vmatprep.subr.mxu0 0.0
  %941 = vmatpush2.msra.mxu0 0.0
  %942 = vmatprep.subr.mxu0 0.0
  %943 = vmatpush2.msra.mxu0 0.0
  %944 = vmatprep.subr.mxu0 0.0
  %945 = vmatpush2.msra.mxu0 0.0
  %946 = vmatprep.subr.mxu0 0.0
  %947 = vmatpush2.msra.mxu0 0.0
  %948 = vmatprep.subr.mxu0 0.0
  %949 = vmatpush2.msra.mxu0 0.0
  %950 = vmatprep.mubr.f32.mxu0 0.0
  %951 = vmatmul.mubr.f32.gmra.mxu0 %v884
  %v952 = vpop.f32.mrf.mxu0
  %v953 = vadd.f32 %v878, %v952
  %v954 = vpop.f32.mrf.mxu0
  %955 = vdwg.mxu0
  %v956 = vadd.f32 %v953, %v415
  %v957 = vxor.u32 %v956, 2147483648
  %v958 = vmul.f32 %v957, 1.442695
  %v959 = vpow.pop %v958
  %v960 = vadd.f32 %v959, 1.0
  %v961 = vrcp.pop %v960
  %v962 = vmul.f32 1.0, %v961
  %v963 = vtanh.pop %v956
  %v964 = vmul.f32 %v962, %v704
  %966 = vrot.lane.b32.xlu0 %v963, 64
  %v967 = vpop.permute.xlu0 %966
  %v969 = vmul.f32 %v962, %v967
  %971 = vrot.lane.b32.xlu0 %v969, 32
  %v972 = vpop.permute.xlu0 %971
  %v974 = vadd.f32 %v964, %v972
  %v975 = vtanh.pop %v974
  %977 = vrot.lane.b32.xlu0 %v975, 64
  %v978 = vpop.permute.xlu0 %977
  %v980 = vmul.f32 %v962, %v978
  %981 = vmatprep.subr.mxu0 0.0
  %982 = vmatpush1.msra.mxu0 0.0
  %983 = vmatprep.subr.mxu0 0.0
  %984 = vmatpush1.msra.mxu0 0.0
  %985 = vmatprep.subr.mxu0 0.0
  %986 = vmatpush1.msra.mxu0 0.0
  %987 = vmatprep.subr.mxu0 0.0
  %988 = vmatpush1.msra.mxu0 0.0
  %989 = vmatprep.subr.mxu0 0.0
  %990 = vmatpush1.msra.mxu0 0.0
  %991 = vmatprep.subr.mxu0 0.0
  %992 = vmatpush1.msra.mxu0 0.0
  %993 = vmatprep.subr.mxu0 0.0
  %994 = vmatpush1.msra.mxu0 0.0
  %995 = vmatprep.subr.mxu0 0.0
  %996 = vmatpush1.msra.mxu0 0.0
  %997 = vmatprep.subr.mxu0 0.0
  %998 = vmatpush1.msra.mxu0 0.0
  %999 = vmatprep.subr.mxu0 0.0
  %1000 = vmatpush1.msra.mxu0 0.0
  %1001 = vmatprep.subr.mxu0 0.0
  %1002 = vmatpush1.msra.mxu0 0.0
  %1003 = vmatprep.subr.mxu0 0.0
  %1004 = vmatpush1.msra.mxu0 0.0
  %1005 = vmatprep.subr.mxu0 0.0
  %1006 = vmatpush1.msra.mxu0 %v15
  %1007 = vmatprep.subr.mxu0 0.0
  %1008 = vmatpush1.msra.mxu0 %v14
  %1009 = vmatprep.subr.mxu0 0.0
  %1010 = vmatpush1.msra.mxu0 %v13
  %1011 = vmatprep.subr.mxu0 0.0
  %1012 = vmatpush1.msra.mxu0 %v12
  %1013 = vmatprep.subr.mxu0 0.0
  %1014 = vmatpush2.msra.mxu0 0.0
  %1015 = vmatprep.subr.mxu0 0.0
  %1016 = vmatpush2.msra.mxu0 0.0
  %1017 = vmatprep.subr.mxu0 0.0
  %1018 = vmatpush2.msra.mxu0 0.0
  %1019 = vmatprep.subr.mxu0 0.0
  %1020 = vmatpush2.msra.mxu0 0.0
  %1021 = vmatprep.subr.mxu0 0.0
  %1022 = vmatpush2.msra.mxu0 0.0
  %1023 = vmatprep.subr.mxu0 0.0
  %1024 = vmatpush2.msra.mxu0 0.0
  %1025 = vmatprep.subr.mxu0 0.0
  %1026 = vmatpush2.msra.mxu0 0.0
  %1027 = vmatprep.subr.mxu0 0.0
  %1028 = vmatpush2.msra.mxu0 0.0
  %1029 = vmatprep.subr.mxu0 0.0
  %1030 = vmatpush2.msra.mxu0 0.0
  %1031 = vmatprep.subr.mxu0 0.0
  %1032 = vmatpush2.msra.mxu0 0.0
  %1033 = vmatprep.subr.mxu0 0.0
  %1034 = vmatpush2.msra.mxu0 0.0
  %1035 = vmatprep.subr.mxu0 0.0
  %1036 = vmatpush2.msra.mxu0 0.0
  %1037 = vmatprep.subr.mxu0 0.0
  %1038 = vmatpush2.msra.mxu0 0.0
  %1039 = vmatprep.subr.mxu0 0.0
  %1040 = vmatpush2.msra.mxu0 0.0
  %1041 = vmatprep.subr.mxu0 0.0
  %1042 = vmatpush2.msra.mxu0 0.0
  %1043 = vmatprep.subr.mxu0 0.0
  %1044 = vmatpush2.msra.mxu0 0.0
  %1045 = vmatprep.mubr.f32.mxu0 0.0
  %1046 = vmatmul.mubr.f32.gmra.mxu0 %v884
  %v1047 = vpop.f32.mrf.mxu0
  %v1048 = vadd.f32 0.0, %v1047
  %v1049 = vpop.f32.mrf.mxu0
  %1050 = vdwg.mxu0
  %v1051 = vadd.f32 %v145, %v1048
  %v1052 = vxor.u32 %v1051, 2147483648
  %v1053 = vmul.f32 %v1052, 1.442695
  %v1054 = vpow.pop %v1053
  %v1055 = vadd.f32 %v1054, 1.0
  %v1056 = vrcp.pop %v1055
  %v1057 = vmul.f32 1.0, %v1056
  %v1058 = vtanh.pop %v1051
  %v1059 = vmul.f32 %v1057, %v799
  %1061 = vrot.lane.b32.xlu0 %v1058, 64
  %v1062 = vpop.permute.xlu0 %1061
  %v1064 = vmul.f32 %v1057, %v1062
  %1066 = vrot.lane.b32.xlu0 %v1064, 32
  %v1067 = vpop.permute.xlu0 %1066
  %v1069 = vadd.f32 %v1059, %v1067
  %v1070 = vtanh.pop %v1069
  %1072 = vrot.lane.b32.xlu0 %v1070, 64
  %v1073 = vpop.permute.xlu0 %1072
  %v1075 = vmul.f32 %v1057, %v1073
  %1077 = vrot.lane.b32.xlu0 %v980, 32
  %v1078 = vpop.permute.xlu0 %1077
  %v1079 = vsel %vm168, %v1078, 0
  %1081 = vmatprep.subr.mxu0 0.0
  %1082 = vmatpush1.msra.mxu0 0.0
  %1083 = vmatprep.subr.mxu0 0.0
  %1084 = vmatpush1.msra.mxu0 0.0
  %1085 = vmatprep.subr.mxu0 0.0
  %1086 = vmatpush1.msra.mxu0 0.0
  %1087 = vmatprep.subr.mxu0 0.0
  %1088 = vmatpush1.msra.mxu0 0.0
  %1089 = vmatprep.subr.mxu0 0.0
  %1090 = vmatpush1.msra.mxu0 0.0
  %1091 = vmatprep.subr.mxu0 0.0
  %1092 = vmatpush1.msra.mxu0 0.0
  %1093 = vmatprep.subr.mxu0 0.0
  %1094 = vmatpush1.msra.mxu0 0.0
  %1095 = vmatprep.subr.mxu0 0.0
  %1096 = vmatpush1.msra.mxu0 0.0
  %1097 = vmatprep.subr.mxu0 0.0
  %1098 = vmatpush1.msra.mxu0 0.0
  %1099 = vmatprep.subr.mxu0 0.0
  %1100 = vmatpush1.msra.mxu0 0.0
  %1101 = vmatprep.subr.mxu0 0.0
  %1102 = vmatpush1.msra.mxu0 0.0
  %1103 = vmatprep.subr.mxu0 0.0
  %1104 = vmatpush1.msra.mxu0 0.0
  %1105 = vmatprep.subr.mxu0 0.0
  %1106 = vmatpush1.msra.mxu0 %v24
  %1107 = vmatprep.subr.mxu0 0.0
  %1108 = vmatpush1.msra.mxu0 %v23
  %1109 = vmatprep.subr.mxu0 0.0
  %1110 = vmatpush1.msra.mxu0 %v22
  %1111 = vmatprep.subr.mxu0 0.0
  %1112 = vmatpush1.msra.mxu0 %v21
  %1113 = vmatprep.subr.mxu0 0.0
  %1114 = vmatpush2.msra.mxu0 0.0
  %1115 = vmatprep.subr.mxu0 0.0
  %1116 = vmatpush2.msra.mxu0 0.0
  %1117 = vmatprep.subr.mxu0 0.0
  %1118 = vmatpush2.msra.mxu0 0.0
  %1119 = vmatprep.subr.mxu0 0.0
  %1120 = vmatpush2.msra.mxu0 0.0
  %1121 = vmatprep.subr.mxu0 0.0
  %1122 = vmatpush2.msra.mxu0 0.0
  %1123 = vmatprep.subr.mxu0 0.0
  %1124 = vmatpush2.msra.mxu0 0.0
  %1125 = vmatprep.subr.mxu0 0.0
  %1126 = vmatpush2.msra.mxu0 0.0
  %1127 = vmatprep.subr.mxu0 0.0
  %1128 = vmatpush2.msra.mxu0 0.0
  %1129 = vmatprep.subr.mxu0 0.0
  %1130 = vmatpush2.msra.mxu0 0.0
  %1131 = vmatprep.subr.mxu0 0.0
  %1132 = vmatpush2.msra.mxu0 0.0
  %1133 = vmatprep.subr.mxu0 0.0
  %1134 = vmatpush2.msra.mxu0 0.0
  %1135 = vmatprep.subr.mxu0 0.0
  %1136 = vmatpush2.msra.mxu0 0.0
  %1137 = vmatprep.subr.mxu0 0.0
  %1138 = vmatpush2.msra.mxu0 0.0
  %1139 = vmatprep.subr.mxu0 0.0
  %1140 = vmatpush2.msra.mxu0 0.0
  %1141 = vmatprep.subr.mxu0 0.0
  %1142 = vmatpush2.msra.mxu0 0.0
  %1143 = vmatprep.subr.mxu0 0.0
  %1144 = vmatpush2.msra.mxu0 0.0
  %1145 = vmatprep.mubr.f32.mxu0 0.0
  %1146 = vmatmul.mubr.f32.gmra.mxu0 %v1079
  %v1147 = vpop.f32.mrf.mxu0
  %v1148 = vadd.f32 0.0, %v1147
  %v1149 = vpop.f32.mrf.mxu0
  %1150 = vdwg.mxu0
  %1152 = vrot.lane.b32.xlu0 %v1075, 32
  %v1153 = vpop.permute.xlu0 %1152
  %v1154 = vsel %vm168, %v1153, 0
  %1156 = vmatprep.subr.mxu0 0.0
  %1157 = vmatpush1.msra.mxu0 0.0
  %1158 = vmatprep.subr.mxu0 0.0
  %1159 = vmatpush1.msra.mxu0 0.0
  %1160 = vmatprep.subr.mxu0 0.0
  %1161 = vmatpush1.msra.mxu0 0.0
  %1162 = vmatprep.subr.mxu0 0.0
  %1163 = vmatpush1.msra.mxu0 0.0
  %1164 = vmatprep.subr.mxu0 0.0
  %1165 = vmatpush1.msra.mxu0 0.0
  %1166 = vmatprep.subr.mxu0 0.0
  %1167 = vmatpush1.msra.mxu0 0.0
  %1168 = vmatprep.subr.mxu0 0.0
  %1169 = vmatpush1.msra.mxu0 0.0
  %1170 = vmatprep.subr.mxu0 0.0
  %1171 = vmatpush1.msra.mxu0 0.0
  %1172 = vmatprep.subr.mxu0 0.0
  %1173 = vmatpush1.msra.mxu0 0.0
  %1174 = vmatprep.subr.mxu0 0.0
  %1175 = vmatpush1.msra.mxu0 0.0
  %1176 = vmatprep.subr.mxu0 0.0
  %1177 = vmatpush1.msra.mxu0 0.0
  %1178 = vmatprep.subr.mxu0 0.0
  %1179 = vmatpush1.msra.mxu0 0.0
  %1180 = vmatprep.subr.mxu0 0.0
  %1181 = vmatpush1.msra.mxu0 %v20
  %1182 = vmatprep.subr.mxu0 0.0
  %1183 = vmatpush1.msra.mxu0 %v19
  %1184 = vmatprep.subr.mxu0 0.0
  %1185 = vmatpush1.msra.mxu0 %v18
  %1186 = vmatprep.subr.mxu0 0.0
  %1187 = vmatpush1.msra.mxu0 %v17
  %1188 = vmatprep.subr.mxu0 0.0
  %1189 = vmatpush2.msra.mxu0 0.0
  %1190 = vmatprep.subr.mxu0 0.0
  %1191 = vmatpush2.msra.mxu0 0.0
  %1192 = vmatprep.subr.mxu0 0.0
  %1193 = vmatpush2.msra.mxu0 0.0
  %1194 = vmatprep.subr.mxu0 0.0
  %1195 = vmatpush2.msra.mxu0 0.0
  %1196 = vmatprep.subr.mxu0 0.0
  %1197 = vmatpush2.msra.mxu0 0.0
  %1198 = vmatprep.subr.mxu0 0.0
  %1199 = vmatpush2.msra.mxu0 0.0
  %1200 = vmatprep.subr.mxu0 0.0
  %1201 = vmatpush2.msra.mxu0 0.0
  %1202 = vmatprep.subr.mxu0 0.0
  %1203 = vmatpush2.msra.mxu0 0.0
  %1204 = vmatprep.subr.mxu0 0.0
  %1205 = vmatpush2.msra.mxu0 0.0
  %1206 = vmatprep.subr.mxu0 0.0
  %1207 = vmatpush2.msra.mxu0 0.0
  %1208 = vmatprep.subr.mxu0 0.0
  %1209 = vmatpush2.msra.mxu0 0.0
  %1210 = vmatprep.subr.mxu0 0.0
  %1211 = vmatpush2.msra.mxu0 0.0
  %1212 = vmatprep.subr.mxu0 0.0
  %1213 = vmatpush2.msra.mxu0 0.0
  %1214 = vmatprep.subr.mxu0 0.0
  %1215 = vmatpush2.msra.mxu0 0.0
  %1216 = vmatprep.subr.mxu0 0.0
  %1217 = vmatpush2.msra.mxu0 0.0
  %1218 = vmatprep.subr.mxu0 0.0
  %1219 = vmatpush2.msra.mxu0 0.0
  %1220 = vmatprep.mubr.f32.mxu0 0.0
  %1221 = vmatmul.mubr.f32.gmra.mxu0 %v1154
  %v1222 = vpop.f32.mrf.mxu0
  %v1223 = vadd.f32 %v1148, %v1222
  %v1224 = vpop.f32.mrf.mxu0
  %1225 = vdwg.mxu0
  %v1226 = vadd.f32 %v1223, %v415
  %v1227 = vxor.u32 %v1226, 2147483648
  %v1228 = vmul.f32 %v1227, 1.442695
  %v1229 = vpow.pop %v1228
  %v1230 = vadd.f32 %v1229, 1.0
  %v1231 = vrcp.pop %v1230
  %v1232 = vmul.f32 1.0, %v1231
  %v1233 = vtanh.pop %v1226
  %v1234 = vmul.f32 %v1232, %v974
  %1236 = vrot.lane.b32.xlu0 %v1233, 64
  %v1237 = vpop.permute.xlu0 %1236
  %v1239 = vmul.f32 %v1232, %v1237
  %1241 = vrot.lane.b32.xlu0 %v1239, 32
  %v1242 = vpop.permute.xlu0 %1241
  %v1244 = vadd.f32 %v1234, %v1242
  %v1245 = vtanh.pop %v1244
  %1247 = vrot.lane.b32.xlu0 %v1245, 64
  %v1248 = vpop.permute.xlu0 %1247
  %v1250 = vmul.f32 %v1232, %v1248
  %1251 = vmatprep.subr.mxu0 0.0
  %1252 = vmatpush1.msra.mxu0 0.0
  %1253 = vmatprep.subr.mxu0 0.0
  %1254 = vmatpush1.msra.mxu0 0.0
  %1255 = vmatprep.subr.mxu0 0.0
  %1256 = vmatpush1.msra.mxu0 0.0
  %1257 = vmatprep.subr.mxu0 0.0
  %1258 = vmatpush1.msra.mxu0 0.0
  %1259 = vmatprep.subr.mxu0 0.0
  %1260 = vmatpush1.msra.mxu0 0.0
  %1261 = vmatprep.subr.mxu0 0.0
  %1262 = vmatpush1.msra.mxu0 0.0
  %1263 = vmatprep.subr.mxu0 0.0
  %1264 = vmatpush1.msra.mxu0 0.0
  %1265 = vmatprep.subr.mxu0 0.0
  %1266 = vmatpush1.msra.mxu0 0.0
  %1267 = vmatprep.subr.mxu0 0.0
  %1268 = vmatpush1.msra.mxu0 0.0
  %1269 = vmatprep.subr.mxu0 0.0
  %1270 = vmatpush1.msra.mxu0 0.0
  %1271 = vmatprep.subr.mxu0 0.0
  %1272 = vmatpush1.msra.mxu0 0.0
  %1273 = vmatprep.subr.mxu0 0.0
  %1274 = vmatpush1.msra.mxu0 0.0
  %1275 = vmatprep.subr.mxu0 0.0
  %1276 = vmatpush1.msra.mxu0 %v15
  %1277 = vmatprep.subr.mxu0 0.0
  %1278 = vmatpush1.msra.mxu0 %v14
  %1279 = vmatprep.subr.mxu0 0.0
  %1280 = vmatpush1.msra.mxu0 %v13
  %1281 = vmatprep.subr.mxu0 0.0
  %1282 = vmatpush1.msra.mxu0 %v12
  %1283 = vmatprep.subr.mxu0 0.0
  %1284 = vmatpush2.msra.mxu0 0.0
  %1285 = vmatprep.subr.mxu0 0.0
  %1286 = vmatpush2.msra.mxu0 0.0
  %1287 = vmatprep.subr.mxu0 0.0
  %1288 = vmatpush2.msra.mxu0 0.0
  %1289 = vmatprep.subr.mxu0 0.0
  %1290 = vmatpush2.msra.mxu0 0.0
  %1291 = vmatprep.subr.mxu0 0.0
  %1292 = vmatpush2.msra.mxu0 0.0
  %1293 = vmatprep.subr.mxu0 0.0
  %1294 = vmatpush2.msra.mxu0 0.0
  %1295 = vmatprep.subr.mxu0 0.0
  %1296 = vmatpush2.msra.mxu0 0.0
  %1297 = vmatprep.subr.mxu0 0.0
  %1298 = vmatpush2.msra.mxu0 0.0
  %1299 = vmatprep.subr.mxu0 0.0
  %1300 = vmatpush2.msra.mxu0 0.0
  %1301 = vmatprep.subr.mxu0 0.0
  %1302 = vmatpush2.msra.mxu0 0.0
  %1303 = vmatprep.subr.mxu0 0.0
  %1304 = vmatpush2.msra.mxu0 0.0
  %1305 = vmatprep.subr.mxu0 0.0
  %1306 = vmatpush2.msra.mxu0 0.0
  %1307 = vmatprep.subr.mxu0 0.0
  %1308 = vmatpush2.msra.mxu0 0.0
  %1309 = vmatprep.subr.mxu0 0.0
  %1310 = vmatpush2.msra.mxu0 0.0
  %1311 = vmatprep.subr.mxu0 0.0
  %1312 = vmatpush2.msra.mxu0 0.0
  %1313 = vmatprep.subr.mxu0 0.0
  %1314 = vmatpush2.msra.mxu0 0.0
  %1315 = vmatprep.mubr.f32.mxu0 0.0
  %1316 = vmatmul.mubr.f32.gmra.mxu0 %v1154
  %v1317 = vpop.f32.mrf.mxu0
  %v1318 = vadd.f32 0.0, %v1317
  %v1319 = vpop.f32.mrf.mxu0
  %1320 = vdwg.mxu0
  %v1321 = vadd.f32 %v150, %v1318
  %v1322 = vxor.u32 %v1321, 2147483648
  %v1323 = vmul.f32 %v1322, 1.442695
  %v1324 = vpow.pop %v1323
  %v1325 = vadd.f32 %v1324, 1.0
  %v1326 = vrcp.pop %v1325
  %v1327 = vmul.f32 1.0, %v1326
  %v1328 = vtanh.pop %v1321
  %v1329 = vmul.f32 %v1327, %v1069
  %1331 = vrot.lane.b32.xlu0 %v1328, 64
  %v1332 = vpop.permute.xlu0 %1331
  %v1334 = vmul.f32 %v1327, %v1332
  %1336 = vrot.lane.b32.xlu0 %v1334, 32
  %v1337 = vpop.permute.xlu0 %1336
  %v1339 = vadd.f32 %v1329, %v1337
  %v1340 = vtanh.pop %v1339
  %1342 = vrot.lane.b32.xlu0 %v1340, 64
  %v1343 = vpop.permute.xlu0 %1342
  %v1345 = vmul.f32 %v1327, %v1343
  %1347 = vrot.lane.b32.xlu0 %v1250, 32
  %v1348 = vpop.permute.xlu0 %1347
  %v1349 = vsel %vm168, %v1348, 0
  %1351 = vmatprep.subr.mxu0 0.0
  %1352 = vmatpush1.msra.mxu0 0.0
  %1353 = vmatprep.subr.mxu0 0.0
  %1354 = vmatpush1.msra.mxu0 0.0
  %1355 = vmatprep.subr.mxu0 0.0
  %1356 = vmatpush1.msra.mxu0 0.0
  %1357 = vmatprep.subr.mxu0 0.0
  %1358 = vmatpush1.msra.mxu0 0.0
  %1359 = vmatprep.subr.mxu0 0.0
  %1360 = vmatpush1.msra.mxu0 0.0
  %1361 = vmatprep.subr.mxu0 0.0
  %1362 = vmatpush1.msra.mxu0 0.0
  %1363 = vmatprep.subr.mxu0 0.0
  %1364 = vmatpush1.msra.mxu0 0.0
  %1365 = vmatprep.subr.mxu0 0.0
  %1366 = vmatpush1.msra.mxu0 0.0
  %1367 = vmatprep.subr.mxu0 0.0
  %1368 = vmatpush1.msra.mxu0 0.0
  %1369 = vmatprep.subr.mxu0 0.0
  %1370 = vmatpush1.msra.mxu0 0.0
  %1371 = vmatprep.subr.mxu0 0.0
  %1372 = vmatpush1.msra.mxu0 0.0
  %1373 = vmatprep.subr.mxu0 0.0
  %1374 = vmatpush1.msra.mxu0 0.0
  %1375 = vmatprep.subr.mxu0 0.0
  %1376 = vmatpush1.msra.mxu0 %v24
  %1377 = vmatprep.subr.mxu0 0.0
  %1378 = vmatpush1.msra.mxu0 %v23
  %1379 = vmatprep.subr.mxu0 0.0
  %1380 = vmatpush1.msra.mxu0 %v22
  %1381 = vmatprep.subr.mxu0 0.0
  %1382 = vmatpush1.msra.mxu0 %v21
  %1383 = vmatprep.subr.mxu0 0.0
  %1384 = vmatpush2.msra.mxu0 0.0
  %1385 = vmatprep.subr.mxu0 0.0
  %1386 = vmatpush2.msra.mxu0 0.0
  %1387 = vmatprep.subr.mxu0 0.0
  %1388 = vmatpush2.msra.mxu0 0.0
  %1389 = vmatprep.subr.mxu0 0.0
  %1390 = vmatpush2.msra.mxu0 0.0
  %1391 = vmatprep.subr.mxu0 0.0
  %1392 = vmatpush2.msra.mxu0 0.0
  %1393 = vmatprep.subr.mxu0 0.0
  %1394 = vmatpush2.msra.mxu0 0.0
  %1395 = vmatprep.subr.mxu0 0.0
  %1396 = vmatpush2.msra.mxu0 0.0
  %1397 = vmatprep.subr.mxu0 0.0
  %1398 = vmatpush2.msra.mxu0 0.0
  %1399 = vmatprep.subr.mxu0 0.0
  %1400 = vmatpush2.msra.mxu0 0.0
  %1401 = vmatprep.subr.mxu0 0.0
  %1402 = vmatpush2.msra.mxu0 0.0
  %1403 = vmatprep.subr.mxu0 0.0
  %1404 = vmatpush2.msra.mxu0 0.0
  %1405 = vmatprep.subr.mxu0 0.0
  %1406 = vmatpush2.msra.mxu0 0.0
  %1407 = vmatprep.subr.mxu0 0.0
  %1408 = vmatpush2.msra.mxu0 0.0
  %1409 = vmatprep.subr.mxu0 0.0
  %1410 = vmatpush2.msra.mxu0 0.0
  %1411 = vmatprep.subr.mxu0 0.0
  %1412 = vmatpush2.msra.mxu0 0.0
  %1413 = vmatprep.subr.mxu0 0.0
  %1414 = vmatpush2.msra.mxu0 0.0
  %1415 = vmatprep.mubr.f32.mxu0 0.0
  %1416 = vmatmul.mubr.f32.gmra.mxu0 %v1349
  %v1417 = vpop.f32.mrf.mxu0
  %v1418 = vadd.f32 0.0, %v1417
  %v1419 = vpop.f32.mrf.mxu0
  %1420 = vdwg.mxu0
  %1422 = vrot.lane.b32.xlu0 %v1345, 32
  %v1423 = vpop.permute.xlu0 %1422
  %v1424 = vsel %vm168, %v1423, 0
  %1426 = vmatprep.subr.mxu0 0.0
  %1427 = vmatpush1.msra.mxu0 0.0
  %1428 = vmatprep.subr.mxu0 0.0
  %1429 = vmatpush1.msra.mxu0 0.0
  %1430 = vmatprep.subr.mxu0 0.0
  %1431 = vmatpush1.msra.mxu0 0.0
  %1432 = vmatprep.subr.mxu0 0.0
  %1433 = vmatpush1.msra.mxu0 0.0
  %1434 = vmatprep.subr.mxu0 0.0
  %1435 = vmatpush1.msra.mxu0 0.0
  %1436 = vmatprep.subr.mxu0 0.0
  %1437 = vmatpush1.msra.mxu0 0.0
  %1438 = vmatprep.subr.mxu0 0.0
  %1439 = vmatpush1.msra.mxu0 0.0
  %1440 = vmatprep.subr.mxu0 0.0
  %1441 = vmatpush1.msra.mxu0 0.0
  %1442 = vmatprep.subr.mxu0 0.0
  %1443 = vmatpush1.msra.mxu0 0.0
  %1444 = vmatprep.subr.mxu0 0.0
  %1445 = vmatpush1.msra.mxu0 0.0
  %1446 = vmatprep.subr.mxu0 0.0
  %1447 = vmatpush1.msra.mxu0 0.0
  %1448 = vmatprep.subr.mxu0 0.0
  %1449 = vmatpush1.msra.mxu0 0.0
  %1450 = vmatprep.subr.mxu0 0.0
  %1451 = vmatpush1.msra.mxu0 %v20
  %1452 = vmatprep.subr.mxu0 0.0
  %1453 = vmatpush1.msra.mxu0 %v19
  %1454 = vmatprep.subr.mxu0 0.0
  %1455 = vmatpush1.msra.mxu0 %v18
  %1456 = vmatprep.subr.mxu0 0.0
  %1457 = vmatpush1.msra.mxu0 %v17
  %1458 = vmatprep.subr.mxu0 0.0
  %1459 = vmatpush2.msra.mxu0 0.0
  %1460 = vmatprep.subr.mxu0 0.0
  %1461 = vmatpush2.msra.mxu0 0.0
  %1462 = vmatprep.subr.mxu0 0.0
  %1463 = vmatpush2.msra.mxu0 0.0
  %1464 = vmatprep.subr.mxu0 0.0
  %1465 = vmatpush2.msra.mxu0 0.0
  %1466 = vmatprep.subr.mxu0 0.0
  %1467 = vmatpush2.msra.mxu0 0.0
  %1468 = vmatprep.subr.mxu0 0.0
  %1469 = vmatpush2.msra.mxu0 0.0
  %1470 = vmatprep.subr.mxu0 0.0
  %1471 = vmatpush2.msra.mxu0 0.0
  %1472 = vmatprep.subr.mxu0 0.0
  %1473 = vmatpush2.msra.mxu0 0.0
  %1474 = vmatprep.subr.mxu0 0.0
  %1475 = vmatpush2.msra.mxu0 0.0
  %1476 = vmatprep.subr.mxu0 0.0
  %1477 = vmatpush2.msra.mxu0 0.0
  %1478 = vmatprep.subr.mxu0 0.0
  %1479 = vmatpush2.msra.mxu0 0.0
  %1480 = vmatprep.subr.mxu0 0.0
  %1481 = vmatpush2.msra.mxu0 0.0
  %1482 = vmatprep.subr.mxu0 0.0
  %1483 = vmatpush2.msra.mxu0 0.0
  %1484 = vmatprep.subr.mxu0 0.0
  %1485 = vmatpush2.msra.mxu0 0.0
  %1486 = vmatprep.subr.mxu0 0.0
  %1487 = vmatpush2.msra.mxu0 0.0
  %1488 = vmatprep.subr.mxu0 0.0
  %1489 = vmatpush2.msra.mxu0 0.0
  %1490 = vmatprep.mubr.f32.mxu0 0.0
  %1491 = vmatmul.mubr.f32.gmra.mxu0 %v1424
  %v1492 = vpop.f32.mrf.mxu0
  %v1493 = vadd.f32 %v1418, %v1492
  %v1494 = vpop.f32.mrf.mxu0
  %1495 = vdwg.mxu0
  %v1496 = vadd.f32 %v1493, %v415
  %v1497 = vxor.u32 %v1496, 2147483648
  %v1498 = vmul.f32 %v1497, 1.442695
  %v1499 = vpow.pop %v1498
  %v1500 = vadd.f32 %v1499, 1.0
  %v1501 = vrcp.pop %v1500
  %v1502 = vmul.f32 1.0, %v1501
  %v1503 = vtanh.pop %v1496
  %v1504 = vmul.f32 %v1502, %v1244
  %1506 = vrot.lane.b32.xlu0 %v1503, 64
  %v1507 = vpop.permute.xlu0 %1506
  %v1509 = vmul.f32 %v1502, %v1507
  %1511 = vrot.lane.b32.xlu0 %v1509, 32
  %v1512 = vpop.permute.xlu0 %1511
  %v1514 = vadd.f32 %v1504, %v1512
  %v1515 = vtanh.pop %v1514
  %1517 = vrot.lane.b32.xlu0 %v1515, 64
  %v1518 = vpop.permute.xlu0 %1517
  %v1520 = vmul.f32 %v1502, %v1518
  %1521 = vmatprep.subr.mxu0 0.0
  %1522 = vmatpush1.msra.mxu0 0.0
  %1523 = vmatprep.subr.mxu0 0.0
  %1524 = vmatpush1.msra.mxu0 0.0
  %1525 = vmatprep.subr.mxu0 0.0
  %1526 = vmatpush1.msra.mxu0 0.0
  %1527 = vmatprep.subr.mxu0 0.0
  %1528 = vmatpush1.msra.mxu0 0.0
  %1529 = vmatprep.subr.mxu0 0.0
  %1530 = vmatpush1.msra.mxu0 0.0
  %1531 = vmatprep.subr.mxu0 0.0
  %1532 = vmatpush1.msra.mxu0 0.0
  %1533 = vmatprep.subr.mxu0 0.0
  %1534 = vmatpush1.msra.mxu0 0.0
  %1535 = vmatprep.subr.mxu0 0.0
  %1536 = vmatpush1.msra.mxu0 0.0
  %1537 = vmatprep.subr.mxu0 0.0
  %1538 = vmatpush1.msra.mxu0 0.0
  %1539 = vmatprep.subr.mxu0 0.0
  %1540 = vmatpush1.msra.mxu0 0.0
  %1541 = vmatprep.subr.mxu0 0.0
  %1542 = vmatpush1.msra.mxu0 0.0
  %1543 = vmatprep.subr.mxu0 0.0
  %1544 = vmatpush1.msra.mxu0 0.0
  %1545 = vmatprep.subr.mxu0 0.0
  %1546 = vmatpush1.msra.mxu0 %v15
  %1547 = vmatprep.subr.mxu0 0.0
  %1548 = vmatpush1.msra.mxu0 %v14
  %1549 = vmatprep.subr.mxu0 0.0
  %1550 = vmatpush1.msra.mxu0 %v13
  %1551 = vmatprep.subr.mxu0 0.0
  %1552 = vmatpush1.msra.mxu0 %v12
  %1553 = vmatprep.subr.mxu0 0.0
  %1554 = vmatpush2.msra.mxu0 0.0
  %1555 = vmatprep.subr.mxu0 0.0
  %1556 = vmatpush2.msra.mxu0 0.0
  %1557 = vmatprep.subr.mxu0 0.0
  %1558 = vmatpush2.msra.mxu0 0.0
  %1559 = vmatprep.subr.mxu0 0.0
  %1560 = vmatpush2.msra.mxu0 0.0
  %1561 = vmatprep.subr.mxu0 0.0
  %1562 = vmatpush2.msra.mxu0 0.0
  %1563 = vmatprep.subr.mxu0 0.0
  %1564 = vmatpush2.msra.mxu0 0.0
  %1565 = vmatprep.subr.mxu0 0.0
  %1566 = vmatpush2.msra.mxu0 0.0
  %1567 = vmatprep.subr.mxu0 0.0
  %1568 = vmatpush2.msra.mxu0 0.0
  %1569 = vmatprep.subr.mxu0 0.0
  %1570 = vmatpush2.msra.mxu0 0.0
  %1571 = vmatprep.subr.mxu0 0.0
  %1572 = vmatpush2.msra.mxu0 0.0
  %1573 = vmatprep.subr.mxu0 0.0
  %1574 = vmatpush2.msra.mxu0 0.0
  %1575 = vmatprep.subr.mxu0 0.0
  %1576 = vmatpush2.msra.mxu0 0.0
  %1577 = vmatprep.subr.mxu0 0.0
  %1578 = vmatpush2.msra.mxu0 0.0
  %1579 = vmatprep.subr.mxu0 0.0
  %1580 = vmatpush2.msra.mxu0 0.0
  %1581 = vmatprep.subr.mxu0 0.0
  %1582 = vmatpush2.msra.mxu0 0.0
  %1583 = vmatprep.subr.mxu0 0.0
  %1584 = vmatpush2.msra.mxu0 0.0
  %1585 = vmatprep.mubr.f32.mxu0 0.0
  %1586 = vmatmul.mubr.f32.gmra.mxu0 %v1424
  %v1587 = vpop.f32.mrf.mxu0
  %v1588 = vadd.f32 0.0, %v1587
  %v1589 = vpop.f32.mrf.mxu0
  %1590 = vdwg.mxu0
  %v1591 = vadd.f32 %v155, %v1588
  %v1592 = vxor.u32 %v1591, 2147483648
  %v1593 = vmul.f32 %v1592, 1.442695
  %v1594 = vpow.pop %v1593
  %v1595 = vadd.f32 %v1594, 1.0
  %v1596 = vrcp.pop %v1595
  %v1597 = vmul.f32 1.0, %v1596
  %v1598 = vtanh.pop %v1591
  %v1599 = vmul.f32 %v1597, %v1339
  %1601 = vrot.lane.b32.xlu0 %v1598, 64
  %v1602 = vpop.permute.xlu0 %1601
  %v1604 = vmul.f32 %v1597, %v1602
  %1606 = vrot.lane.b32.xlu0 %v1604, 32
  %v1607 = vpop.permute.xlu0 %1606
  %v1609 = vadd.f32 %v1599, %v1607
  %v1610 = vtanh.pop %v1609
  %1612 = vrot.lane.b32.xlu0 %v1610, 64
  %v1613 = vpop.permute.xlu0 %1612
  %v1615 = vmul.f32 %v1597, %v1613
  %1617 = vrot.lane.b32.xlu0 %v1520, 32
  %v1618 = vpop.permute.xlu0 %1617
  %v1619 = vsel %vm168, %v1618, 0
  %1621 = vmatprep.subr.mxu0 0.0
  %1622 = vmatpush1.msra.mxu0 0.0
  %1623 = vmatprep.subr.mxu0 0.0
  %1624 = vmatpush1.msra.mxu0 0.0
  %1625 = vmatprep.subr.mxu0 0.0
  %1626 = vmatpush1.msra.mxu0 0.0
  %1627 = vmatprep.subr.mxu0 0.0
  %1628 = vmatpush1.msra.mxu0 0.0
  %1629 = vmatprep.subr.mxu0 0.0
  %1630 = vmatpush1.msra.mxu0 0.0
  %1631 = vmatprep.subr.mxu0 0.0
  %1632 = vmatpush1.msra.mxu0 0.0
  %1633 = vmatprep.subr.mxu0 0.0
  %1634 = vmatpush1.msra.mxu0 0.0
  %1635 = vmatprep.subr.mxu0 0.0
  %1636 = vmatpush1.msra.mxu0 0.0
  %1637 = vmatprep.subr.mxu0 0.0
  %1638 = vmatpush1.msra.mxu0 0.0
  %1639 = vmatprep.subr.mxu0 0.0
  %1640 = vmatpush1.msra.mxu0 0.0
  %1641 = vmatprep.subr.mxu0 0.0
  %1642 = vmatpush1.msra.mxu0 0.0
  %1643 = vmatprep.subr.mxu0 0.0
  %1644 = vmatpush1.msra.mxu0 0.0
  %1645 = vmatprep.subr.mxu0 0.0
  %1646 = vmatpush1.msra.mxu0 %v24
  %1647 = vmatprep.subr.mxu0 0.0
  %1648 = vmatpush1.msra.mxu0 %v23
  %1649 = vmatprep.subr.mxu0 0.0
  %1650 = vmatpush1.msra.mxu0 %v22
  %1651 = vmatprep.subr.mxu0 0.0
  %1652 = vmatpush1.msra.mxu0 %v21
  %1653 = vmatprep.subr.mxu0 0.0
  %1654 = vmatpush2.msra.mxu0 0.0
  %1655 = vmatprep.subr.mxu0 0.0
  %1656 = vmatpush2.msra.mxu0 0.0
  %1657 = vmatprep.subr.mxu0 0.0
  %1658 = vmatpush2.msra.mxu0 0.0
  %1659 = vmatprep.subr.mxu0 0.0
  %1660 = vmatpush2.msra.mxu0 0.0
  %1661 = vmatprep.subr.mxu0 0.0
  %1662 = vmatpush2.msra.mxu0 0.0
  %1663 = vmatprep.subr.mxu0 0.0
  %1664 = vmatpush2.msra.mxu0 0.0
  %1665 = vmatprep.subr.mxu0 0.0
  %1666 = vmatpush2.msra.mxu0 0.0
  %1667 = vmatprep.subr.mxu0 0.0
  %1668 = vmatpush2.msra.mxu0 0.0
  %1669 = vmatprep.subr.mxu0 0.0
  %1670 = vmatpush2.msra.mxu0 0.0
  %1671 = vmatprep.subr.mxu0 0.0
  %1672 = vmatpush2.msra.mxu0 0.0
  %1673 = vmatprep.subr.mxu0 0.0
  %1674 = vmatpush2.msra.mxu0 0.0
  %1675 = vmatprep.subr.mxu0 0.0
  %1676 = vmatpush2.msra.mxu0 0.0
  %1677 = vmatprep.subr.mxu0 0.0
  %1678 = vmatpush2.msra.mxu0 0.0
  %1679 = vmatprep.subr.mxu0 0.0
  %1680 = vmatpush2.msra.mxu0 0.0
  %1681 = vmatprep.subr.mxu0 0.0
  %1682 = vmatpush2.msra.mxu0 0.0
  %1683 = vmatprep.subr.mxu0 0.0
  %1684 = vmatpush2.msra.mxu0 0.0
  %1685 = vmatprep.mubr.f32.mxu0 0.0
  %1686 = vmatmul.mubr.f32.gmra.mxu0 %v1619
  %v1687 = vpop.f32.mrf.mxu0
  %v1688 = vadd.f32 0.0, %v1687
  %v1689 = vpop.f32.mrf.mxu0
  %1690 = vdwg.mxu0
  %1692 = vrot.lane.b32.xlu0 %v1615, 32
  %v1693 = vpop.permute.xlu0 %1692
  %v1694 = vsel %vm168, %v1693, 0
  %1696 = vmatprep.subr.mxu0 0.0
  %1697 = vmatpush1.msra.mxu0 0.0
  %1698 = vmatprep.subr.mxu0 0.0
  %1699 = vmatpush1.msra.mxu0 0.0
  %1700 = vmatprep.subr.mxu0 0.0
  %1701 = vmatpush1.msra.mxu0 0.0
  %1702 = vmatprep.subr.mxu0 0.0
  %1703 = vmatpush1.msra.mxu0 0.0
  %1704 = vmatprep.subr.mxu0 0.0
  %1705 = vmatpush1.msra.mxu0 0.0
  %1706 = vmatprep.subr.mxu0 0.0
  %1707 = vmatpush1.msra.mxu0 0.0
  %1708 = vmatprep.subr.mxu0 0.0
  %1709 = vmatpush1.msra.mxu0 0.0
  %1710 = vmatprep.subr.mxu0 0.0
  %1711 = vmatpush1.msra.mxu0 0.0
  %1712 = vmatprep.subr.mxu0 0.0
  %1713 = vmatpush1.msra.mxu0 0.0
  %1714 = vmatprep.subr.mxu0 0.0
  %1715 = vmatpush1.msra.mxu0 0.0
  %1716 = vmatprep.subr.mxu0 0.0
  %1717 = vmatpush1.msra.mxu0 0.0
  %1718 = vmatprep.subr.mxu0 0.0
  %1719 = vmatpush1.msra.mxu0 0.0
  %1720 = vmatprep.subr.mxu0 0.0
  %1721 = vmatpush1.msra.mxu0 %v20
  %1722 = vmatprep.subr.mxu0 0.0
  %1723 = vmatpush1.msra.mxu0 %v19
  %1724 = vmatprep.subr.mxu0 0.0
  %1725 = vmatpush1.msra.mxu0 %v18
  %1726 = vmatprep.subr.mxu0 0.0
  %1727 = vmatpush1.msra.mxu0 %v17
  %1728 = vmatprep.subr.mxu0 0.0
  %1729 = vmatpush2.msra.mxu0 0.0
  %1730 = vmatprep.subr.mxu0 0.0
  %1731 = vmatpush2.msra.mxu0 0.0
  %1732 = vmatprep.subr.mxu0 0.0
  %1733 = vmatpush2.msra.mxu0 0.0
  %1734 = vmatprep.subr.mxu0 0.0
  %1735 = vmatpush2.msra.mxu0 0.0
  %1736 = vmatprep.subr.mxu0 0.0
  %1737 = vmatpush2.msra.mxu0 0.0
  %1738 = vmatprep.subr.mxu0 0.0
  %1739 = vmatpush2.msra.mxu0 0.0
  %1740 = vmatprep.subr.mxu0 0.0
  %1741 = vmatpush2.msra.mxu0 0.0
  %1742 = vmatprep.subr.mxu0 0.0
  %1743 = vmatpush2.msra.mxu0 0.0
  %1744 = vmatprep.subr.mxu0 0.0
  %1745 = vmatpush2.msra.mxu0 0.0
  %1746 = vmatprep.subr.mxu0 0.0
  %1747 = vmatpush2.msra.mxu0 0.0
  %1748 = vmatprep.subr.mxu0 0.0
  %1749 = vmatpush2.msra.mxu0 0.0
  %1750 = vmatprep.subr.mxu0 0.0
  %1751 = vmatpush2.msra.mxu0 0.0
  %1752 = vmatprep.subr.mxu0 0.0
  %1753 = vmatpush2.msra.mxu0 0.0
  %1754 = vmatprep.subr.mxu0 0.0
  %1755 = vmatpush2.msra.mxu0 0.0
  %1756 = vmatprep.subr.mxu0 0.0
  %1757 = vmatpush2.msra.mxu0 0.0
  %1758 = vmatprep.subr.mxu0 0.0
  %1759 = vmatpush2.msra.mxu0 0.0
  %1760 = vmatprep.mubr.f32.mxu0 0.0
  %1761 = vmatmul.mubr.f32.gmra.mxu0 %v1694
  %v1762 = vpop.f32.mrf.mxu0
  %v1763 = vadd.f32 %v1688, %v1762
  %v1764 = vpop.f32.mrf.mxu0
  %1765 = vdwg.mxu0
  %v1766 = vadd.f32 %v1763, %v415
  %v1767 = vxor.u32 %v1766, 2147483648
  %v1768 = vmul.f32 %v1767, 1.442695
  %v1769 = vpow.pop %v1768
  %v1770 = vadd.f32 %v1769, 1.0
  %v1771 = vrcp.pop %v1770
  %v1772 = vmul.f32 1.0, %v1771
  %v1773 = vtanh.pop %v1766
  %v1774 = vmul.f32 %v1772, %v1514
  %1776 = vrot.lane.b32.xlu0 %v1773, 64
  %v1777 = vpop.permute.xlu0 %1776
  %v1779 = vmul.f32 %v1772, %v1777
  %1781 = vrot.lane.b32.xlu0 %v1779, 32
  %v1782 = vpop.permute.xlu0 %1781
  %v1784 = vadd.f32 %v1774, %v1782
  %v1785 = vtanh.pop %v1784
  %1787 = vrot.lane.b32.xlu0 %v1785, 64
  %v1788 = vpop.permute.xlu0 %1787
  %v1790 = vmul.f32 %v1772, %v1788
  %1791 = vmatprep.subr.mxu0 0.0
  %1792 = vmatpush1.msra.mxu0 0.0
  %1793 = vmatprep.subr.mxu0 0.0
  %1794 = vmatpush1.msra.mxu0 0.0
  %1795 = vmatprep.subr.mxu0 0.0
  %1796 = vmatpush1.msra.mxu0 0.0
  %1797 = vmatprep.subr.mxu0 0.0
  %1798 = vmatpush1.msra.mxu0 0.0
  %1799 = vmatprep.subr.mxu0 0.0
  %1800 = vmatpush1.msra.mxu0 0.0
  %1801 = vmatprep.subr.mxu0 0.0
  %1802 = vmatpush1.msra.mxu0 0.0
  %1803 = vmatprep.subr.mxu0 0.0
  %1804 = vmatpush1.msra.mxu0 0.0
  %1805 = vmatprep.subr.mxu0 0.0
  %1806 = vmatpush1.msra.mxu0 0.0
  %1807 = vmatprep.subr.mxu0 0.0
  %1808 = vmatpush1.msra.mxu0 0.0
  %1809 = vmatprep.subr.mxu0 0.0
  %1810 = vmatpush1.msra.mxu0 0.0
  %1811 = vmatprep.subr.mxu0 0.0
  %1812 = vmatpush1.msra.mxu0 0.0
  %1813 = vmatprep.subr.mxu0 0.0
  %1814 = vmatpush1.msra.mxu0 0.0
  %1815 = vmatprep.subr.mxu0 0.0
  %1816 = vmatpush1.msra.mxu0 %v15
  %1817 = vmatprep.subr.mxu0 0.0
  %1818 = vmatpush1.msra.mxu0 %v14
  %1819 = vmatprep.subr.mxu0 0.0
  %1820 = vmatpush1.msra.mxu0 %v13
  %1821 = vmatprep.subr.mxu0 0.0
  %1822 = vmatpush1.msra.mxu0 %v12
  %1823 = vmatprep.subr.mxu0 0.0
  %1824 = vmatpush2.msra.mxu0 0.0
  %1825 = vmatprep.subr.mxu0 0.0
  %1826 = vmatpush2.msra.mxu0 0.0
  %1827 = vmatprep.subr.mxu0 0.0
  %1828 = vmatpush2.msra.mxu0 0.0
  %1829 = vmatprep.subr.mxu0 0.0
  %1830 = vmatpush2.msra.mxu0 0.0
  %1831 = vmatprep.subr.mxu0 0.0
  %1832 = vmatpush2.msra.mxu0 0.0
  %1833 = vmatprep.subr.mxu0 0.0
  %1834 = vmatpush2.msra.mxu0 0.0
  %1835 = vmatprep.subr.mxu0 0.0
  %1836 = vmatpush2.msra.mxu0 0.0
  %1837 = vmatprep.subr.mxu0 0.0
  %1838 = vmatpush2.msra.mxu0 0.0
  %1839 = vmatprep.subr.mxu0 0.0
  %1840 = vmatpush2.msra.mxu0 0.0
  %1841 = vmatprep.subr.mxu0 0.0
  %1842 = vmatpush2.msra.mxu0 0.0
  %1843 = vmatprep.subr.mxu0 0.0
  %1844 = vmatpush2.msra.mxu0 0.0
  %1845 = vmatprep.subr.mxu0 0.0
  %1846 = vmatpush2.msra.mxu0 0.0
  %1847 = vmatprep.subr.mxu0 0.0
  %1848 = vmatpush2.msra.mxu0 0.0
  %1849 = vmatprep.subr.mxu0 0.0
  %1850 = vmatpush2.msra.mxu0 0.0
  %1851 = vmatprep.subr.mxu0 0.0
  %1852 = vmatpush2.msra.mxu0 0.0
  %1853 = vmatprep.subr.mxu0 0.0
  %1854 = vmatpush2.msra.mxu0 0.0
  %1855 = vmatprep.mubr.f32.mxu0 0.0
  %1856 = vmatmul.mubr.f32.gmra.mxu0 %v1694
  %v1857 = vpop.f32.mrf.mxu0
  %v1858 = vadd.f32 0.0, %v1857
  %v1859 = vpop.f32.mrf.mxu0
  %1860 = vdwg.mxu0
  %v1861 = vadd.f32 %v160, %v1858
  %v1862 = vxor.u32 %v1861, 2147483648
  %v1863 = vmul.f32 %v1862, 1.442695
  %v1864 = vpow.pop %v1863
  %v1865 = vadd.f32 %v1864, 1.0
  %v1866 = vrcp.pop %v1865
  %v1867 = vmul.f32 1.0, %v1866
  %v1868 = vtanh.pop %v1861
  %v1869 = vmul.f32 %v1867, %v1609
  %1871 = vrot.lane.b32.xlu0 %v1868, 64
  %v1872 = vpop.permute.xlu0 %1871
  %v1874 = vmul.f32 %v1867, %v1872
  %1876 = vrot.lane.b32.xlu0 %v1874, 32
  %v1877 = vpop.permute.xlu0 %1876
  %v1879 = vadd.f32 %v1869, %v1877
  %v1880 = vtanh.pop %v1879
  %1882 = vrot.lane.b32.xlu0 %v1880, 64
  %v1883 = vpop.permute.xlu0 %1882
  %v1885 = vmul.f32 %v1867, %v1883
  %1887 = vrot.lane.b32.xlu0 %v1790, 32
  %v1888 = vpop.permute.xlu0 %1887
  %v1889 = vsel %vm168, %v1888, 0
  %1891 = vmatprep.subr.mxu0 0.0
  %1892 = vmatpush1.msra.mxu0 0.0
  %1893 = vmatprep.subr.mxu0 0.0
  %1894 = vmatpush1.msra.mxu0 0.0
  %1895 = vmatprep.subr.mxu0 0.0
  %1896 = vmatpush1.msra.mxu0 0.0
  %1897 = vmatprep.subr.mxu0 0.0
  %1898 = vmatpush1.msra.mxu0 0.0
  %1899 = vmatprep.subr.mxu0 0.0
  %1900 = vmatpush1.msra.mxu0 0.0
  %1901 = vmatprep.subr.mxu0 0.0
  %1902 = vmatpush1.msra.mxu0 0.0
  %1903 = vmatprep.subr.mxu0 0.0
  %1904 = vmatpush1.msra.mxu0 0.0
  %1905 = vmatprep.subr.mxu0 0.0
  %1906 = vmatpush1.msra.mxu0 0.0
  %1907 = vmatprep.subr.mxu0 0.0
  %1908 = vmatpush1.msra.mxu0 0.0
  %1909 = vmatprep.subr.mxu0 0.0
  %1910 = vmatpush1.msra.mxu0 0.0
  %1911 = vmatprep.subr.mxu0 0.0
  %1912 = vmatpush1.msra.mxu0 0.0
  %1913 = vmatprep.subr.mxu0 0.0
  %1914 = vmatpush1.msra.mxu0 0.0
  %1915 = vmatprep.subr.mxu0 0.0
  %1916 = vmatpush1.msra.mxu0 %v24
  %1917 = vmatprep.subr.mxu0 0.0
  %1918 = vmatpush1.msra.mxu0 %v23
  %1919 = vmatprep.subr.mxu0 0.0
  %1920 = vmatpush1.msra.mxu0 %v22
  %1921 = vmatprep.subr.mxu0 0.0
  %1922 = vmatpush1.msra.mxu0 %v21
  %1923 = vmatprep.subr.mxu0 0.0
  %1924 = vmatpush2.msra.mxu0 0.0
  %1925 = vmatprep.subr.mxu0 0.0
  %1926 = vmatpush2.msra.mxu0 0.0
  %1927 = vmatprep.subr.mxu0 0.0
  %1928 = vmatpush2.msra.mxu0 0.0
  %1929 = vmatprep.subr.mxu0 0.0
  %1930 = vmatpush2.msra.mxu0 0.0
  %1931 = vmatprep.subr.mxu0 0.0
  %1932 = vmatpush2.msra.mxu0 0.0
  %1933 = vmatprep.subr.mxu0 0.0
  %1934 = vmatpush2.msra.mxu0 0.0
  %1935 = vmatprep.subr.mxu0 0.0
  %1936 = vmatpush2.msra.mxu0 0.0
  %1937 = vmatprep.subr.mxu0 0.0
  %1938 = vmatpush2.msra.mxu0 0.0
  %1939 = vmatprep.subr.mxu0 0.0
  %1940 = vmatpush2.msra.mxu0 0.0
  %1941 = vmatprep.subr.mxu0 0.0
  %1942 = vmatpush2.msra.mxu0 0.0
  %1943 = vmatprep.subr.mxu0 0.0
  %1944 = vmatpush2.msra.mxu0 0.0
  %1945 = vmatprep.subr.mxu0 0.0
  %1946 = vmatpush2.msra.mxu0 0.0
  %1947 = vmatprep.subr.mxu0 0.0
  %1948 = vmatpush2.msra.mxu0 0.0
  %1949 = vmatprep.subr.mxu0 0.0
  %1950 = vmatpush2.msra.mxu0 0.0
  %1951 = vmatprep.subr.mxu0 0.0
  %1952 = vmatpush2.msra.mxu0 0.0
  %1953 = vmatprep.subr.mxu0 0.0
  %1954 = vmatpush2.msra.mxu0 0.0
  %1955 = vmatprep.mubr.f32.mxu0 0.0
  %1956 = vmatmul.mubr.f32.gmra.mxu0 %v1889
  %v1957 = vpop.f32.mrf.mxu0
  %v1958 = vadd.f32 0.0, %v1957
  %v1959 = vpop.f32.mrf.mxu0
  %1960 = vdwg.mxu0
  %1962 = vrot.lane.b32.xlu0 %v1885, 32
  %v1963 = vpop.permute.xlu0 %1962
  %v1964 = vsel %vm168, %v1963, 0
  %1966 = vmatprep.subr.mxu0 0.0
  %1967 = vmatpush1.msra.mxu0 0.0
  %1968 = vmatprep.subr.mxu0 0.0
  %1969 = vmatpush1.msra.mxu0 0.0
  %1970 = vmatprep.subr.mxu0 0.0
  %1971 = vmatpush1.msra.mxu0 0.0
  %1972 = vmatprep.subr.mxu0 0.0
  %1973 = vmatpush1.msra.mxu0 0.0
  %1974 = vmatprep.subr.mxu0 0.0
  %1975 = vmatpush1.msra.mxu0 0.0
  %1976 = vmatprep.subr.mxu0 0.0
  %1977 = vmatpush1.msra.mxu0 0.0
  %1978 = vmatprep.subr.mxu0 0.0
  %1979 = vmatpush1.msra.mxu0 0.0
  %1980 = vmatprep.subr.mxu0 0.0
  %1981 = vmatpush1.msra.mxu0 0.0
  %1982 = vmatprep.subr.mxu0 0.0
  %1983 = vmatpush1.msra.mxu0 0.0
  %1984 = vmatprep.subr.mxu0 0.0
  %1985 = vmatpush1.msra.mxu0 0.0
  %1986 = vmatprep.subr.mxu0 0.0
  %1987 = vmatpush1.msra.mxu0 0.0
  %1988 = vmatprep.subr.mxu0 0.0
  %1989 = vmatpush1.msra.mxu0 0.0
  %1990 = vmatprep.subr.mxu0 0.0
  %1991 = vmatpush1.msra.mxu0 %v20
  %1992 = vmatprep.subr.mxu0 0.0
  %1993 = vmatpush1.msra.mxu0 %v19
  %1994 = vmatprep.subr.mxu0 0.0
  %1995 = vmatpush1.msra.mxu0 %v18
  %1996 = vmatprep.subr.mxu0 0.0
  %1997 = vmatpush1.msra.mxu0 %v17
  %1998 = vmatprep.subr.mxu0 0.0
  %1999 = vmatpush2.msra.mxu0 0.0
  %2000 = vmatprep.subr.mxu0 0.0
  %2001 = vmatpush2.msra.mxu0 0.0
  %2002 = vmatprep.subr.mxu0 0.0
  %2003 = vmatpush2.msra.mxu0 0.0
  %2004 = vmatprep.subr.mxu0 0.0
  %2005 = vmatpush2.msra.mxu0 0.0
  %2006 = vmatprep.subr.mxu0 0.0
  %2007 = vmatpush2.msra.mxu0 0.0
  %2008 = vmatprep.subr.mxu0 0.0
  %2009 = vmatpush2.msra.mxu0 0.0
  %2010 = vmatprep.subr.mxu0 0.0
  %2011 = vmatpush2.msra.mxu0 0.0
  %2012 = vmatprep.subr.mxu0 0.0
  %2013 = vmatpush2.msra.mxu0 0.0
  %2014 = vmatprep.subr.mxu0 0.0
  %2015 = vmatpush2.msra.mxu0 0.0
  %2016 = vmatprep.subr.mxu0 0.0
  %2017 = vmatpush2.msra.mxu0 0.0
  %2018 = vmatprep.subr.mxu0 0.0
  %2019 = vmatpush2.msra.mxu0 0.0
  %2020 = vmatprep.subr.mxu0 0.0
  %2021 = vmatpush2.msra.mxu0 0.0
  %2022 = vmatprep.subr.mxu0 0.0
  %2023 = vmatpush2.msra.mxu0 0.0
  %2024 = vmatprep.subr.mxu0 0.0
  %2025 = vmatpush2.msra.mxu0 0.0
  %2026 = vmatprep.subr.mxu0 0.0
  %2027 = vmatpush2.msra.mxu0 0.0
  %2028 = vmatprep.subr.mxu0 0.0
  %2029 = vmatpush2.msra.mxu0 0.0
  %2030 = vmatprep.mubr.f32.mxu0 0.0
  %2031 = vmatmul.mubr.f32.gmra.mxu0 %v1964
  %v2032 = vpop.f32.mrf.mxu0
  %v2033 = vadd.f32 %v1958, %v2032
  %v2034 = vpop.f32.mrf.mxu0
  %2035 = vdwg.mxu0
  %v2036 = vadd.f32 %v2033, %v415
  %v2037 = vxor.u32 %v2036, 2147483648
  %v2038 = vmul.f32 %v2037, 1.442695
  %v2039 = vpow.pop %v2038
  %v2040 = vadd.f32 %v2039, 1.0
  %v2041 = vrcp.pop %v2040
  %v2042 = vmul.f32 1.0, %v2041
  %v2043 = vtanh.pop %v2036
  %v2044 = vmul.f32 %v2042, %v1784
  %2046 = vrot.lane.b32.xlu0 %v2043, 64
  %v2047 = vpop.permute.xlu0 %2046
  %v2049 = vmul.f32 %v2042, %v2047
  %2051 = vrot.lane.b32.xlu0 %v2049, 32
  %v2052 = vpop.permute.xlu0 %2051
  %v2054 = vadd.f32 %v2044, %v2052
  %v2055 = vtanh.pop %v2054
  %2057 = vrot.lane.b32.xlu0 %v2055, 64
  %v2058 = vpop.permute.xlu0 %2057
  %v2060 = vmul.f32 %v2042, %v2058
  %2061 = vmatprep.subr.mxu0 0.0
  %2062 = vmatpush1.msra.mxu0 0.0
  %2063 = vmatprep.subr.mxu0 0.0
  %2064 = vmatpush1.msra.mxu0 0.0
  %2065 = vmatprep.subr.mxu0 0.0
  %2066 = vmatpush1.msra.mxu0 0.0
  %2067 = vmatprep.subr.mxu0 0.0
  %2068 = vmatpush1.msra.mxu0 0.0
  %2069 = vmatprep.subr.mxu0 0.0
  %2070 = vmatpush1.msra.mxu0 0.0
  %2071 = vmatprep.subr.mxu0 0.0
  %2072 = vmatpush1.msra.mxu0 0.0
  %2073 = vmatprep.subr.mxu0 0.0
  %2074 = vmatpush1.msra.mxu0 0.0
  %2075 = vmatprep.subr.mxu0 0.0
  %2076 = vmatpush1.msra.mxu0 0.0
  %2077 = vmatprep.subr.mxu0 0.0
  %2078 = vmatpush1.msra.mxu0 0.0
  %2079 = vmatprep.subr.mxu0 0.0
  %2080 = vmatpush1.msra.mxu0 0.0
  %2081 = vmatprep.subr.mxu0 0.0
  %2082 = vmatpush1.msra.mxu0 0.0
  %2083 = vmatprep.subr.mxu0 0.0
  %2084 = vmatpush1.msra.mxu0 0.0
  %2085 = vmatprep.subr.mxu0 0.0
  %2086 = vmatpush1.msra.mxu0 %v15
  %2087 = vmatprep.subr.mxu0 0.0
  %2088 = vmatpush1.msra.mxu0 %v14
  %2089 = vmatprep.subr.mxu0 0.0
  %2090 = vmatpush1.msra.mxu0 %v13
  %2091 = vmatprep.subr.mxu0 0.0
  %2092 = vmatpush1.msra.mxu0 %v12
  %2093 = vmatprep.subr.mxu0 0.0
  %2094 = vmatpush2.msra.mxu0 0.0
  %2095 = vmatprep.subr.mxu0 0.0
  %2096 = vmatpush2.msra.mxu0 0.0
  %2097 = vmatprep.subr.mxu0 0.0
  %2098 = vmatpush2.msra.mxu0 0.0
  %2099 = vmatprep.subr.mxu0 0.0
  %2100 = vmatpush2.msra.mxu0 0.0
  %2101 = vmatprep.subr.mxu0 0.0
  %2102 = vmatpush2.msra.mxu0 0.0
  %2103 = vmatprep.subr.mxu0 0.0
  %2104 = vmatpush2.msra.mxu0 0.0
  %2105 = vmatprep.subr.mxu0 0.0
  %2106 = vmatpush2.msra.mxu0 0.0
  %2107 = vmatprep.subr.mxu0 0.0
  %2108 = vmatpush2.msra.mxu0 0.0
  %2109 = vmatprep.subr.mxu0 0.0
  %2110 = vmatpush2.msra.mxu0 0.0
  %2111 = vmatprep.subr.mxu0 0.0
  %2112 = vmatpush2.msra.mxu0 0.0
  %2113 = vmatprep.subr.mxu0 0.0
  %2114 = vmatpush2.msra.mxu0 0.0
  %2115 = vmatprep.subr.mxu0 0.0
  %2116 = vmatpush2.msra.mxu0 0.0
  %2117 = vmatprep.subr.mxu0 0.0
  %2118 = vmatpush2.msra.mxu0 0.0
  %2119 = vmatprep.subr.mxu0 0.0
  %2120 = vmatpush2.msra.mxu0 0.0
  %2121 = vmatprep.subr.mxu0 0.0
  %2122 = vmatpush2.msra.mxu0 0.0
  %2123 = vmatprep.subr.mxu0 0.0
  %2124 = vmatpush2.msra.mxu0 0.0
  %2125 = vmatprep.mubr.f32.mxu0 0.0
  %2126 = vmatmul.mubr.f32.gmra.mxu0 %v1964
  %v2127 = vpop.f32.mrf.mxu0
  %v2128 = vadd.f32 0.0, %v2127
  %v2129 = vpop.f32.mrf.mxu0
  %2130 = vdwg.mxu0
  %v2131 = vadd.f32 %v165, %v2128
  %v2132 = vxor.u32 %v2131, 2147483648
  %v2133 = vmul.f32 %v2132, 1.442695
  %v2134 = vpow.pop %v2133
  %v2135 = vadd.f32 %v2134, 1.0
  %v2136 = vrcp.pop %v2135
  %v2137 = vmul.f32 1.0, %v2136
  %v2138 = vtanh.pop %v2131
  %v2139 = vmul.f32 %v2137, %v1879
  %2141 = vrot.lane.b32.xlu0 %v2138, 64
  %v2142 = vpop.permute.xlu0 %2141
  %v2144 = vmul.f32 %v2137, %v2142
  %2146 = vrot.lane.b32.xlu0 %v2144, 32
  %v2147 = vpop.permute.xlu0 %2146
  %v2149 = vadd.f32 %v2139, %v2147
  %v2150 = vtanh.pop %v2149
  %2152 = vrot.lane.b32.xlu0 %v2150, 64
  %v2153 = vpop.permute.xlu0 %2152
  %v2155 = vmul.f32 %v2137, %v2153
  %2157 = vrot.lane.b32.xlu0 %v2060, 32
  %v2158 = vpop.permute.xlu0 %2157
  %v2159 = vsel %vm168, %v2158, 0
  %2161 = vmatprep.subr.mxu0 0.0
  %2162 = vmatpush1.msra.mxu0 0.0
  %2163 = vmatprep.subr.mxu0 0.0
  %2164 = vmatpush1.msra.mxu0 0.0
  %2165 = vmatprep.subr.mxu0 0.0
  %2166 = vmatpush1.msra.mxu0 0.0
  %2167 = vmatprep.subr.mxu0 0.0
  %2168 = vmatpush1.msra.mxu0 0.0
  %2169 = vmatprep.subr.mxu0 0.0
  %2170 = vmatpush1.msra.mxu0 0.0
  %2171 = vmatprep.subr.mxu0 0.0
  %2172 = vmatpush1.msra.mxu0 0.0
  %2173 = vmatprep.subr.mxu0 0.0
  %2174 = vmatpush1.msra.mxu0 0.0
  %2175 = vmatprep.subr.mxu0 0.0
  %2176 = vmatpush1.msra.mxu0 0.0
  %2177 = vmatprep.subr.mxu0 0.0
  %2178 = vmatpush1.msra.mxu0 0.0
  %2179 = vmatprep.subr.mxu0 0.0
  %2180 = vmatpush1.msra.mxu0 0.0
  %2181 = vmatprep.subr.mxu0 0.0
  %2182 = vmatpush1.msra.mxu0 0.0
  %2183 = vmatprep.subr.mxu0 0.0
  %2184 = vmatpush1.msra.mxu0 0.0
  %2185 = vmatprep.subr.mxu0 0.0
  %2186 = vmatpush1.msra.mxu0 %v24
  %2187 = vmatprep.subr.mxu0 0.0
  %2188 = vmatpush1.msra.mxu0 %v23
  %2189 = vmatprep.subr.mxu0 0.0
  %2190 = vmatpush1.msra.mxu0 %v22
  %2191 = vmatprep.subr.mxu0 0.0
  %2192 = vmatpush1.msra.mxu0 %v21
  %2193 = vmatprep.subr.mxu0 0.0
  %2194 = vmatpush2.msra.mxu0 0.0
  %2195 = vmatprep.subr.mxu0 0.0
  %2196 = vmatpush2.msra.mxu0 0.0
  %2197 = vmatprep.subr.mxu0 0.0
  %2198 = vmatpush2.msra.mxu0 0.0
  %2199 = vmatprep.subr.mxu0 0.0
  %2200 = vmatpush2.msra.mxu0 0.0
  %2201 = vmatprep.subr.mxu0 0.0
  %2202 = vmatpush2.msra.mxu0 0.0
  %2203 = vmatprep.subr.mxu0 0.0
  %2204 = vmatpush2.msra.mxu0 0.0
  %2205 = vmatprep.subr.mxu0 0.0
  %2206 = vmatpush2.msra.mxu0 0.0
  %2207 = vmatprep.subr.mxu0 0.0
  %2208 = vmatpush2.msra.mxu0 0.0
  %2209 = vmatprep.subr.mxu0 0.0
  %2210 = vmatpush2.msra.mxu0 0.0
  %2211 = vmatprep.subr.mxu0 0.0
  %2212 = vmatpush2.msra.mxu0 0.0
  %2213 = vmatprep.subr.mxu0 0.0
  %2214 = vmatpush2.msra.mxu0 0.0
  %2215 = vmatprep.subr.mxu0 0.0
  %2216 = vmatpush2.msra.mxu0 0.0
  %2217 = vmatprep.subr.mxu0 0.0
  %2218 = vmatpush2.msra.mxu0 0.0
  %2219 = vmatprep.subr.mxu0 0.0
  %2220 = vmatpush2.msra.mxu0 0.0
  %2221 = vmatprep.subr.mxu0 0.0
  %2222 = vmatpush2.msra.mxu0 0.0
  %2223 = vmatprep.subr.mxu0 0.0
  %2224 = vmatpush2.msra.mxu0 0.0
  %2225 = vmatprep.mubr.f32.mxu0 0.0
  %2226 = vmatmul.mubr.f32.gmra.mxu0 %v2159
  %v2227 = vpop.f32.mrf.mxu0
  %v2228 = vadd.f32 0.0, %v2227
  %v2229 = vpop.f32.mrf.mxu0
  %2230 = vdwg.mxu0
  %2232 = vrot.lane.b32.xlu0 %v2155, 32
  %v2233 = vpop.permute.xlu0 %2232
  %v2234 = vsel %vm168, %v2233, 0
  %2236 = vmatprep.subr.mxu0 0.0
  %2237 = vmatpush1.msra.mxu0 0.0
  %2238 = vmatprep.subr.mxu0 0.0
  %2239 = vmatpush1.msra.mxu0 0.0
  %2240 = vmatprep.subr.mxu0 0.0
  %2241 = vmatpush1.msra.mxu0 0.0
  %2242 = vmatprep.subr.mxu0 0.0
  %2243 = vmatpush1.msra.mxu0 0.0
  %2244 = vmatprep.subr.mxu0 0.0
  %2245 = vmatpush1.msra.mxu0 0.0
  %2246 = vmatprep.subr.mxu0 0.0
  %2247 = vmatpush1.msra.mxu0 0.0
  %2248 = vmatprep.subr.mxu0 0.0
  %2249 = vmatpush1.msra.mxu0 0.0
  %2250 = vmatprep.subr.mxu0 0.0
  %2251 = vmatpush1.msra.mxu0 0.0
  %2252 = vmatprep.subr.mxu0 0.0
  %2253 = vmatpush1.msra.mxu0 0.0
  %2254 = vmatprep.subr.mxu0 0.0
  %2255 = vmatpush1.msra.mxu0 0.0
  %2256 = vmatprep.subr.mxu0 0.0
  %2257 = vmatpush1.msra.mxu0 0.0
  %2258 = vmatprep.subr.mxu0 0.0
  %2259 = vmatpush1.msra.mxu0 0.0
  %2260 = vmatprep.subr.mxu0 0.0
  %2261 = vmatpush1.msra.mxu0 %v20
  %2262 = vmatprep.subr.mxu0 0.0
  %2263 = vmatpush1.msra.mxu0 %v19
  %2264 = vmatprep.subr.mxu0 0.0
  %2265 = vmatpush1.msra.mxu0 %v18
  %2266 = vmatprep.subr.mxu0 0.0
  %2267 = vmatpush1.msra.mxu0 %v17
  %2268 = vmatprep.subr.mxu0 0.0
  %2269 = vmatpush2.msra.mxu0 0.0
  %2270 = vmatprep.subr.mxu0 0.0
  %2271 = vmatpush2.msra.mxu0 0.0
  %2272 = vmatprep.subr.mxu0 0.0
  %2273 = vmatpush2.msra.mxu0 0.0
  %2274 = vmatprep.subr.mxu0 0.0
  %2275 = vmatpush2.msra.mxu0 0.0
  %2276 = vmatprep.subr.mxu0 0.0
  %2277 = vmatpush2.msra.mxu0 0.0
  %2278 = vmatprep.subr.mxu0 0.0
  %2279 = vmatpush2.msra.mxu0 0.0
  %2280 = vmatprep.subr.mxu0 0.0
  %2281 = vmatpush2.msra.mxu0 0.0
  %2282 = vmatprep.subr.mxu0 0.0
  %2283 = vmatpush2.msra.mxu0 0.0
  %2284 = vmatprep.subr.mxu0 0.0
  %2285 = vmatpush2.msra.mxu0 0.0
  %2286 = vmatprep.subr.mxu0 0.0
  %2287 = vmatpush2.msra.mxu0 0.0
  %2288 = vmatprep.subr.mxu0 0.0
  %2289 = vmatpush2.msra.mxu0 0.0
  %2290 = vmatprep.subr.mxu0 0.0
  %2291 = vmatpush2.msra.mxu0 0.0
  %2292 = vmatprep.subr.mxu0 0.0
  %2293 = vmatpush2.msra.mxu0 0.0
  %2294 = vmatprep.subr.mxu0 0.0
  %2295 = vmatpush2.msra.mxu0 0.0
  %2296 = vmatprep.subr.mxu0 0.0
  %2297 = vmatpush2.msra.mxu0 0.0
  %2298 = vmatprep.subr.mxu0 0.0
  %2299 = vmatpush2.msra.mxu0 0.0
  %2300 = vmatprep.mubr.f32.mxu0 0.0
  %2301 = vmatmul.mubr.f32.gmra.mxu0 %v2234
  %v2302 = vpop.f32.mrf.mxu0
  %v2303 = vadd.f32 %v2228, %v2302
  %v2304 = vpop.f32.mrf.mxu0
  %2305 = vdwg.mxu0
  %v2306 = vadd.f32 %v2303, %v415
  %v2307 = vxor.u32 %v2306, 2147483648
  %v2308 = vmul.f32 %v2307, 1.442695
  %v2309 = vpow.pop %v2308
  %v2310 = vadd.f32 %v2309, 1.0
  %v2311 = vrcp.pop %v2310
  %v2312 = vmul.f32 1.0, %v2311
  %v2313 = vtanh.pop %v2306
  %v2314 = vmul.f32 %v2312, %v2054
  %2316 = vrot.lane.b32.xlu0 %v2313, 64
  %v2317 = vpop.permute.xlu0 %2316
  %v2319 = vmul.f32 %v2312, %v2317
  %2321 = vrot.lane.b32.xlu0 %v2319, 32
  %v2322 = vpop.permute.xlu0 %2321
  %v2324 = vadd.f32 %v2314, %v2322
  %v2325 = vtanh.pop %v2324
  %2327 = vrot.lane.b32.xlu0 %v2325, 64
  %v2328 = vpop.permute.xlu0 %2327
  %v2330 = vmul.f32 %v2312, %v2328
  %v2331 = vld [vmem:[%s1 + $0x80] sm:$0x1]
  %v2332 = vld [vmem:[%s1 + $0x78] sm:$0x1]
  %v2333 = vlaneseq
  %v2334 = vshrl.u32 %v2333, 7
  %v2335 = vsub.s32 0, %v2334
  %v2336 = vrot.slane %v2332, %v2335
  %2338 = vrot.lane.b32.xlu0 %v2336, 96
  %v2339 = vpop.permute.xlu0 %2338
  %v2341 = vmul.f32 %v2330, %v2339
  %2343 = vrot.lane.b32.xlu0 %v2341, 32
  %v2344 = vpop.permute.xlu0 %2343
  %v2346 = vsel %vm168, %v2344, 0.0
  %2347 = vadd.xlane.f32.xlu0 %v2346
  %v2348 = vpop.xlane.xlu0 %2347
  %v2349 = vlaneseq
  %v2350 = vshrl.u32 %v2349, 7
  %v2351 = vsub.s32 0, %v2350
  %v2352 = vrot.slane %v2331, %v2351
  %v2353 = vadd.f32 %v2348, %v2352
  %vm2354 = vcmask 7168
  %2355 = vst.msk [vmem:[%s2] sm:$0xff] %vm2354, %v2353
  // Predicated region
  $region10: #{lstm_model_forward.1} parent=0 // pred_check
    _
  $region11: #{lstm_model_forward.1} parent=0 // pred_check_branch
    %2357 = sbr.rel (0) target = $region13
  $region12: #{lstm_model_forward.1} parent=0 // pred_region
    _
  $region13: #{lstm_model_forward.1} parent=0 // pred_fallthru
    _
  // Predicated region
  $region14: #{lstm_model_forward.1} parent=0 // pred_check
    _
  $region15: #{lstm_model_forward.1} parent=0 // pred_check_branch
    %2359 = sbr.rel (0) target = $region17
  $region16: #{lstm_model_forward.1} parent=0 // pred_region
    _
  $region17: #{lstm_model_forward.1} parent=0 // pred_fallthru
    _

</llo_original>
